<compile_context>
chip_gen: v7x
topology: tpu7x:2x2x1
jax: 0.10.0
libtpu: 0.0.40
codegen_flags: <defaults>
</compile_context>

<pallas_src>
import functools

import jax
import jax.numpy as jnp
from jax.experimental import pallas as pl
from jax.experimental.pallas import tpu as pltpu


# ------------------------------ Pallas kernel --------------------------------

def _up_double_conv_kernel(x1_ref, x2_ref, awt_ref, masks_ref,
                           w1a_ref, w1b_ref, b1_ref, w2_ref, b2_ref,
                           o_ref, *, h_taps, tap_offsets, ext):
    """One batch element: upsample(x1)+pad, concat(x2, x1), (conv+BN+ReLU)x2.

    x1_ref:    (1, h_lo, C1, w_lo)  low-res feature map (H-major so rows are
                                    cheap major-dim loads), bf16
    x2_ref:    (1, C2, H*W)         skip connection, flat spatial, bf16
    awt_ref:   (w_lo, W)            width-axis upsample+pad matrix, bf16
    masks_ref: (9, H*W)             per-tap validity masks (f32)
    w1a_ref:   (9*mid, C2)          conv1 weights acting on x2 (BN1 folded), bf16
    w1b_ref:   (9*mid, C1)          conv1 weights acting on upsampled x1, bf16
    w2_ref:    (9*Cout, mid)        conv2 weights (BN2 folded), bf16
    b1/b2_ref: (mid,1)/(Cout,1)     folded BN biases, f32
    o_ref:     (1, Cout, H*W)       output, f32 (lane-dense store)
    """
    S = x2_ref.shape[-1]
    c1 = x1_ref.shape[2]
    mid = b1_ref.shape[0]
    cout = b2_ref.shape[0]
    W = awt_ref.shape[1]

    masks = masks_ref[...]                                    # (9, S) f32
    awt = awt_ref[...]                                        # (w_lo, W) bf16

    # --- separable bilinear 2x upsample (align_corners=True) + F.pad of x1 ---
    # Width axis: one tiny bf16 matmul per low-res row (major-dim ref reads).
    n_rows_lo = x1_ref.shape[1]
    xw = [jnp.dot(x1_ref[0, h], awt, preferred_element_type=jnp.float32)
          for h in range(n_rows_lo)]                          # h_lo x (c1, W)
    # Height axis: static 2-tap lerp per output row (python-float coeffs incl.
    # the F.pad offset), lane-concatenated straight into the flat layout.
    pieces = []
    for inside, lo, hi, ca, cb in h_taps:                     # static unroll
        if inside:
            pieces.append(ca * xw[lo] + cb * xw[hi])
        else:
            pieces.append(jnp.zeros((c1, W), jnp.float32))
    x1_up = jnp.concatenate(pieces, axis=1).astype(jnp.bfloat16)   # (c1, S)

    x2 = x2_ref[0]                                            # (c2, S) bf16

    def conv3x3_shift(y_all, n_out, bias):
        # y_all: (9*n_out, S) f32 with per-tap rows [t*n_out, (t+1)*n_out).
        # Shift-the-output conv: each tap's result is a static lane shift of a
        # zero-extended value, masked for halo / row wrap, accumulated in f32.
        zpad = jnp.zeros((9 * n_out, ext), jnp.float32)
        ye = jnp.concatenate([zpad, y_all, zpad], axis=1)     # (9*n_out, S+2e)
        acc = jnp.zeros((n_out, S), jnp.float32)
        for t, off in enumerate(tap_offsets):                 # static unroll
            acc = acc + (ye[t * n_out:(t + 1) * n_out, off:off + S]
                         * masks[t:t + 1, :])
        return acc + bias                                     # BN bias (f32)

    # --- conv1 + BN + ReLU (channel concat fused via split weights) ----------
    y1 = (jnp.dot(w1a_ref[...], x2, preferred_element_type=jnp.float32)
          + jnp.dot(w1b_ref[...], x1_up, preferred_element_type=jnp.float32))
    h = jnp.maximum(conv3x3_shift(y1, mid, b1_ref[...]), 0.0)        # (mid, S)

    # --- conv2 + BN + ReLU ----------------------------------------------------
    y2 = jnp.dot(w2_ref[...], h.astype(jnp.bfloat16),
                 preferred_element_type=jnp.float32)
    y = jnp.maximum(conv3x3_shift(y2, cout, b2_ref[...]), 0.0)       # (cout, S)
    o_ref[0] = y.astype(o_ref.dtype)                                 # lane-dense


def _up_forward(x1, x2f, awt, masks, w1a, w1b, b1, w2, b2,
                *, h_taps, tap_offsets, ext):
    B, h_lo, c1, w_lo = x1.shape
    _, c2, S = x2f.shape
    mid = b1.shape[0]
    cout = b2.shape[0]
    W = awt.shape[1]

    kernel = functools.partial(_up_double_conv_kernel, h_taps=h_taps,
                               tap_offsets=tap_offsets, ext=ext)

    return pl.pallas_call(
        kernel,
        out_shape=jax.ShapeDtypeStruct((B, cout, S), jnp.float32),
        grid=(B,),
        in_specs=[
            pl.BlockSpec((1, h_lo, c1, w_lo), lambda b: (b, 0, 0, 0)),  # x1
            pl.BlockSpec((1, c2, S), lambda b: (b, 0, 0)),              # x2
            pl.BlockSpec((w_lo, W), lambda b: (0, 0)),                  # awT
            pl.BlockSpec((9, S), lambda b: (0, 0)),                     # masks
            pl.BlockSpec((9 * mid, c2), lambda b: (0, 0)),              # w1a
            pl.BlockSpec((9 * mid, c1), lambda b: (0, 0)),              # w1b
            pl.BlockSpec((mid, 1), lambda b: (0, 0)),                   # bias1
            pl.BlockSpec((9 * cout, mid), lambda b: (0, 0)),            # w2
            pl.BlockSpec((cout, 1), lambda b: (0, 0)),                  # bias2
        ],
        out_specs=pl.BlockSpec((1, cout, S), lambda b: (b, 0, 0)),
        compiler_params=pltpu.CompilerParams(
            dimension_semantics=("parallel",)),
    )(x1, x2f, awt, masks, w1a, w1b, b1, w2, b2)


# ---------------------------- static glue (cached) ----------------------------

@functools.lru_cache(maxsize=None)
def _axis_lerp_taps(n_in, n_out):
    """Static 2-tap lerp (lo, hi, a, b) per output index for bilinear 2x
    upsample (align_corners=True) followed by F.pad along one axis."""
    n_up = 2 * n_in
    pad_lo = (n_out - n_up) // 2
    taps = []
    for o in range(n_out):
        u = o - pad_lo
        if 0 <= u < n_up:
            pos = u * (n_in - 1) / (n_up - 1) if n_up > 1 else 0.0
            pos = min(max(pos, 0.0), float(n_in - 1))
            lo = int(pos)
            hi = min(lo + 1, n_in - 1)
            frac = pos - lo
            taps.append((True, lo, hi, 1.0 - frac, frac))
        else:                                   # outside padded region -> zero
            taps.append((False, 0, 0, 0.0, 0.0))
    return tuple(taps)


@functools.lru_cache(maxsize=None)
def _width_upsample_matrix(w_in, w_out):
    """(w_in, w_out) bf16 matrix: x_row(w_in) @ M -> upsampled+padded row."""
    cols = []
    for inside, lo, hi, ca, cb in _axis_lerp_taps(w_in, w_out):
        col = [0.0] * w_in
        if inside:
            col[lo] += ca
            col[hi] += cb
        cols.append(col)
    m = jnp.array(cols, dtype=jnp.float32).T        # (w_in, w_out)
    return m.astype(jnp.bfloat16)


@functools.lru_cache(maxsize=None)
def _tap_masks_and_offsets(H, W):
    """Per-tap validity mask (f32) and static lane offset on the flat grid."""
    o = jnp.arange(H * W, dtype=jnp.int32)
    i, j = o // W, o % W
    ext = W + 1                                     # zero-extension per side
    masks, offsets = [], []
    for kh in range(3):
        for kw in range(3):
            dh, dw = kh - 1, kw - 1
            valid = (i + dh >= 0) & (i + dh < H) & (j + dw >= 0) & (j + dw < W)
            masks.append(valid.astype(jnp.float32))
            offsets.append(ext + dh * W + dw)
    return jnp.stack(masks, axis=0), tuple(offsets), ext


def _fold_bn(gamma, beta, running_mean, running_var, eps=1e-5):
    scale = gamma / jnp.sqrt(running_var + eps)
    return scale, beta - running_mean * scale


# ----------------------------------- module -----------------------------------

class UpPallas:
    """Up(in_channels_x1, in_channels_x2, out_channels, bilinear=True)."""

    def __init__(self, in_channels_x1, in_channels_x2, out_channels, key):
        c1, c2 = in_channels_x1, in_channels_x2
        cin = c1 + c2
        mid = out_channels
        self.c1, self.c2, self.mid, self.cout = c1, c2, mid, out_channels

        k1, k2 = jax.random.split(key)
        # PyTorch layout (Cout, Cin, 3, 3); Cin order follows
        # torch.cat([x2, x1], dim=1): x2 channels first, then x1 channels.
        w1_t = 0.1 * jax.random.normal(k1, (mid, cin, 3, 3), jnp.float32)
        w2_t = 0.1 * jax.random.normal(k2, (out_channels, mid, 3, 3),
                                       jnp.float32)

        # Eval-mode BatchNorm (PyTorch defaults): fold scale into weights,
        # keep only the bias for the kernel epilogue.
        s1, b1 = _fold_bn(jnp.ones((mid,)), jnp.zeros((mid,)),
                          jnp.zeros((mid,)), jnp.ones((mid,)))
        s2, b2 = _fold_bn(jnp.ones((out_channels,)), jnp.zeros((out_channels,)),
                          jnp.zeros((out_channels,)), jnp.ones((out_channels,)))
        w1_t = w1_t * s1[:, None, None, None]
        w2_t = w2_t * s2[:, None, None, None]

        # Shift-the-output weight packing: rows [t*Cout, (t+1)*Cout) hold the
        # (Cout, Cin) slice of tap t = kh*3 + kw, matching the kernel's tap
        # ordering.  Conv1 is split into the x2 part and the x1 part so the
        # channel concat never materializes.
        w1_all = jnp.transpose(w1_t, (2, 3, 0, 1)).reshape(9 * mid, cin)
        self.w1a = w1_all[:, :c2].astype(jnp.bfloat16)        # acts on x2
        self.w1b = w1_all[:, c2:].astype(jnp.bfloat16)        # acts on up(x1)
        self.w2 = (jnp.transpose(w2_t, (2, 3, 0, 1))
                   .reshape(9 * out_channels, mid).astype(jnp.bfloat16))
        self.b1 = b1.reshape(mid, 1).astype(jnp.float32)
        self.b2 = b2.reshape(out_channels, 1).astype(jnp.float32)

    def __call__(self, x1_nchw, x2_nchw):
        B, c1, h_lo, w_lo = x1_nchw.shape
        _, c2, H, W = x2_nchw.shape
        assert c1 == self.c1 and c2 == self.c2

        # Cached per-shape glue (Python tap tables + tiny bf16/f32 constants).
        h_taps = _axis_lerp_taps(h_lo, H)
        awt = _width_upsample_matrix(w_lo, W)
        masks, offsets, ext = _tap_masks_and_offsets(H, W)

        # x1 reordered H-major (tiny tensor) so in-kernel row reads are
        # major-dim loads; x2 just flattens spatial (metadata-only for NCHW).
        x1b = jnp.transpose(x1_nchw, (0, 2, 1, 3)).astype(jnp.bfloat16)
        x2b = x2_nchw.reshape(B, c2, H * W).astype(jnp.bfloat16)

        y = _up_forward(x1b, x2b, awt, masks,
                        self.w1a, self.w1b, self.b1, self.w2, self.b2,
                        h_taps=h_taps, tap_offsets=offsets, ext=ext)
        return y.reshape(B, self.cout, H, W)


# ------------------------------------ main ------------------------------------

if __name__ == "__main__":
    key = jax.random.PRNGKey(0)
    k_x1, k_x2, k_w = jax.random.split(key, 3)

    B = 2
    C1, C2, Cout = 8, 4, 8           # in_channels_x1, in_channels_x2, out
    H1, W1 = 8, 8                    # low-res feature map
    H2, W2 = 16, 16                  # skip-connection feature map (2x)

    x1 = jax.random.normal(k_x1, (B, C1, H1, W1), jnp.float32)   # NCHW
    x2 = jax.random.normal(k_x2, (B, C2, H2, W2), jnp.float32)   # NCHW

    up = UpPallas(C1, C2, Cout, k_w)
    out = up(x1, x2)
    jax.block_until_ready(out)

    assert out.shape == (B, Cout, H2, W2), out.shape
    print("KERNEL_OK")
</pallas_src>

<mosaic_0001>
module attributes {stable_mosaic.version = 11 : i64} {
  func.func @_up_double_conv_kernel(%arg0: i32, %arg1: memref<1x8x8x8xbf16, #tpu.memory_space<vmem>>, %arg2: memref<1x4x256xbf16, #tpu.memory_space<vmem>>, %arg3: memref<8x16xbf16, #tpu.memory_space<vmem>>, %arg4: memref<9x256xf32, #tpu.memory_space<vmem>>, %arg5: memref<72x4xbf16, #tpu.memory_space<vmem>>, %arg6: memref<72x8xbf16, #tpu.memory_space<vmem>>, %arg7: memref<8x1xf32, #tpu.memory_space<vmem>>, %arg8: memref<72x8xbf16, #tpu.memory_space<vmem>>, %arg9: memref<8x1xf32, #tpu.memory_space<vmem>>, %arg10: memref<1x8x256xf32, #tpu.memory_space<vmem>>) attributes {dimension_semantics = [#tpu.dimension_semantics<parallel>], iteration_bounds = array<i64: 2>, scalar_prefetch = 0 : i64, scratch_operands = 0 : i64, tpu.core_type = #tpu.core_type<tc>, window_params = [{transform_indices = @transform_0, window_bounds = array<i64: 1, 8, 8, 8>}, {transform_indices = @transform_1, window_bounds = array<i64: 1, 4, 256>}, {pipeline_mode = #tpu.pipeline_mode<synchronous>, transform_indices = @transform_2, window_bounds = array<i64: 8, 16>}, {pipeline_mode = #tpu.pipeline_mode<synchronous>, transform_indices = @transform_3, window_bounds = array<i64: 9, 256>}, {pipeline_mode = #tpu.pipeline_mode<synchronous>, transform_indices = @transform_4, window_bounds = array<i64: 72, 4>}, {pipeline_mode = #tpu.pipeline_mode<synchronous>, transform_indices = @transform_5, window_bounds = array<i64: 72, 8>}, {pipeline_mode = #tpu.pipeline_mode<synchronous>, transform_indices = @transform_6, window_bounds = array<i64: 8, 1>}, {pipeline_mode = #tpu.pipeline_mode<synchronous>, transform_indices = @transform_7, window_bounds = array<i64: 72, 8>}, {pipeline_mode = #tpu.pipeline_mode<synchronous>, transform_indices = @transform_8, window_bounds = array<i64: 8, 1>}, {transform_indices = @transform_9, window_bounds = array<i64: 1, 8, 256>}]} {
    %c0 = arith.constant 0 : index
    %c0_0 = arith.constant 0 : index
    %0 = vector.load %arg4[%c0, %c0_0] : memref<9x256xf32, #tpu.memory_space<vmem>>, vector<9x256xf32>
    %c0_1 = arith.constant 0 : index
    %c0_2 = arith.constant 0 : index
    %1 = vector.load %arg3[%c0_1, %c0_2] : memref<8x16xbf16, #tpu.memory_space<vmem>>, vector<8x16xbf16>
    %c0_3 = arith.constant 0 : index
    %c0_4 = arith.constant 0 : index
    %c0_5 = arith.constant 0 : index
    %c0_6 = arith.constant 0 : index
    %2 = vector.load %arg1[%c0_3, %c0_4, %c0_5, %c0_6] : memref<1x8x8x8xbf16, #tpu.memory_space<vmem>>, vector<1x1x8x8xbf16>
    %3 = vector.shape_cast %2 : vector<1x1x8x8xbf16> to vector<8x8xbf16>
    %cst = arith.constant dense<0.000000e+00> : vector<8x16xf32>
    %4 = tpu.matmul %3, %1, %cst {dimension_numbers = #tpu.dot_dimension_numbers<[1], [0], [0], [1], [0, 0, 1, 1], [], []>} : vector<8x8xbf16>, vector<8x16xbf16>, vector<8x16xf32> -> vector<8x16xf32>
    %c0_7 = arith.constant 0 : index
    %c1 = arith.constant 1 : index
    %c0_8 = arith.constant 0 : index
    %c0_9 = arith.constant 0 : index
    %5 = vector.load %arg1[%c0_7, %c1, %c0_8, %c0_9] : memref<1x8x8x8xbf16, #tpu.memory_space<vmem>>, vector<1x1x8x8xbf16>
    %6 = vector.shape_cast %5 : vector<1x1x8x8xbf16> to vector<8x8xbf16>
    %cst_10 = arith.constant dense<0.000000e+00> : vector<8x16xf32>
    %7 = tpu.matmul %6, %1, %cst_10 {dimension_numbers = #tpu.dot_dimension_numbers<[1], [0], [0], [1], [0, 0, 1, 1], [], []>} : vector<8x8xbf16>, vector<8x16xbf16>, vector<8x16xf32> -> vector<8x16xf32>
    %c0_11 = arith.constant 0 : index
    %c2 = arith.constant 2 : index
    %c0_12 = arith.constant 0 : index
    %c0_13 = arith.constant 0 : index
    %8 = vector.load %arg1[%c0_11, %c2, %c0_12, %c0_13] : memref<1x8x8x8xbf16, #tpu.memory_space<vmem>>, vector<1x1x8x8xbf16>
    %9 = vector.shape_cast %8 : vector<1x1x8x8xbf16> to vector<8x8xbf16>
    %cst_14 = arith.constant dense<0.000000e+00> : vector<8x16xf32>
    %10 = tpu.matmul %9, %1, %cst_14 {dimension_numbers = #tpu.dot_dimension_numbers<[1], [0], [0], [1], [0, 0, 1, 1], [], []>} : vector<8x8xbf16>, vector<8x16xbf16>, vector<8x16xf32> -> vector<8x16xf32>
    %c0_15 = arith.constant 0 : index
    %c3 = arith.constant 3 : index
    %c0_16 = arith.constant 0 : index
    %c0_17 = arith.constant 0 : index
    %11 = vector.load %arg1[%c0_15, %c3, %c0_16, %c0_17] : memref<1x8x8x8xbf16, #tpu.memory_space<vmem>>, vector<1x1x8x8xbf16>
    %12 = vector.shape_cast %11 : vector<1x1x8x8xbf16> to vector<8x8xbf16>
    %cst_18 = arith.constant dense<0.000000e+00> : vector<8x16xf32>
    %13 = tpu.matmul %12, %1, %cst_18 {dimension_numbers = #tpu.dot_dimension_numbers<[1], [0], [0], [1], [0, 0, 1, 1], [], []>} : vector<8x8xbf16>, vector<8x16xbf16>, vector<8x16xf32> -> vector<8x16xf32>
    %c0_19 = arith.constant 0 : index
    %c4 = arith.constant 4 : index
    %c0_20 = arith.constant 0 : index
    %c0_21 = arith.constant 0 : index
    %14 = vector.load %arg1[%c0_19, %c4, %c0_20, %c0_21] : memref<1x8x8x8xbf16, #tpu.memory_space<vmem>>, vector<1x1x8x8xbf16>
    %15 = vector.shape_cast %14 : vector<1x1x8x8xbf16> to vector<8x8xbf16>
    %cst_22 = arith.constant dense<0.000000e+00> : vector<8x16xf32>
    %16 = tpu.matmul %15, %1, %cst_22 {dimension_numbers = #tpu.dot_dimension_numbers<[1], [0], [0], [1], [0, 0, 1, 1], [], []>} : vector<8x8xbf16>, vector<8x16xbf16>, vector<8x16xf32> -> vector<8x16xf32>
    %c0_23 = arith.constant 0 : index
    %c5 = arith.constant 5 : index
    %c0_24 = arith.constant 0 : index
    %c0_25 = arith.constant 0 : index
    %17 = vector.load %arg1[%c0_23, %c5, %c0_24, %c0_25] : memref<1x8x8x8xbf16, #tpu.memory_space<vmem>>, vector<1x1x8x8xbf16>
    %18 = vector.shape_cast %17 : vector<1x1x8x8xbf16> to vector<8x8xbf16>
    %cst_26 = arith.constant dense<0.000000e+00> : vector<8x16xf32>
    %19 = tpu.matmul %18, %1, %cst_26 {dimension_numbers = #tpu.dot_dimension_numbers<[1], [0], [0], [1], [0, 0, 1, 1], [], []>} : vector<8x8xbf16>, vector<8x16xbf16>, vector<8x16xf32> -> vector<8x16xf32>
    %c0_27 = arith.constant 0 : index
    %c6 = arith.constant 6 : index
    %c0_28 = arith.constant 0 : index
    %c0_29 = arith.constant 0 : index
    %20 = vector.load %arg1[%c0_27, %c6, %c0_28, %c0_29] : memref<1x8x8x8xbf16, #tpu.memory_space<vmem>>, vector<1x1x8x8xbf16>
    %21 = vector.shape_cast %20 : vector<1x1x8x8xbf16> to vector<8x8xbf16>
    %cst_30 = arith.constant dense<0.000000e+00> : vector<8x16xf32>
    %22 = tpu.matmul %21, %1, %cst_30 {dimension_numbers = #tpu.dot_dimension_numbers<[1], [0], [0], [1], [0, 0, 1, 1], [], []>} : vector<8x8xbf16>, vector<8x16xbf16>, vector<8x16xf32> -> vector<8x16xf32>
    %c0_31 = arith.constant 0 : index
    %c7 = arith.constant 7 : index
    %c0_32 = arith.constant 0 : index
    %c0_33 = arith.constant 0 : index
    %23 = vector.load %arg1[%c0_31, %c7, %c0_32, %c0_33] : memref<1x8x8x8xbf16, #tpu.memory_space<vmem>>, vector<1x1x8x8xbf16>
    %24 = vector.shape_cast %23 : vector<1x1x8x8xbf16> to vector<8x8xbf16>
    %cst_34 = arith.constant dense<0.000000e+00> : vector<8x16xf32>
    %25 = tpu.matmul %24, %1, %cst_34 {dimension_numbers = #tpu.dot_dimension_numbers<[1], [0], [0], [1], [0, 0, 1, 1], [], []>} : vector<8x8xbf16>, vector<8x16xbf16>, vector<8x16xf32> -> vector<8x16xf32>
    %cst_35 = arith.constant 1.000000e+00 : f32
    %26 = vector.broadcast %cst_35 : f32 to vector<8x16xf32>
    %27 = arith.mulf %26, %4 : vector<8x16xf32>
    %cst_36 = arith.constant 0.000000e+00 : f32
    %28 = vector.broadcast %cst_36 : f32 to vector<8x16xf32>
    %29 = arith.mulf %28, %7 : vector<8x16xf32>
    %30 = arith.addf %27, %29 : vector<8x16xf32>
    %cst_37 = arith.constant 0.533333361 : f32
    %31 = vector.broadcast %cst_37 : f32 to vector<8x16xf32>
    %32 = arith.mulf %31, %4 : vector<8x16xf32>
    %cst_38 = arith.constant 0.466666669 : f32
    %33 = vector.broadcast %cst_38 : f32 to vector<8x16xf32>
    %34 = arith.mulf %33, %7 : vector<8x16xf32>
    %35 = arith.addf %32, %34 : vector<8x16xf32>
    %cst_39 = arith.constant 0.0666666701 : f32
    %36 = vector.broadcast %cst_39 : f32 to vector<8x16xf32>
    %37 = arith.mulf %36, %4 : vector<8x16xf32>
    %cst_40 = arith.constant 0.933333337 : f32
    %38 = vector.broadcast %cst_40 : f32 to vector<8x16xf32>
    %39 = arith.mulf %38, %7 : vector<8x16xf32>
    %40 = arith.addf %37, %39 : vector<8x16xf32>
    %cst_41 = arith.constant 6.000000e-01 : f32
    %41 = vector.broadcast %cst_41 : f32 to vector<8x16xf32>
    %42 = arith.mulf %41, %7 : vector<8x16xf32>
    %cst_42 = arith.constant 4.000000e-01 : f32
    %43 = vector.broadcast %cst_42 : f32 to vector<8x16xf32>
    %44 = arith.mulf %43, %10 : vector<8x16xf32>
    %45 = arith.addf %42, %44 : vector<8x16xf32>
    %cst_43 = arith.constant 0.13333334 : f32
    %46 = vector.broadcast %cst_43 : f32 to vector<8x16xf32>
    %47 = arith.mulf %46, %7 : vector<8x16xf32>
    %cst_44 = arith.constant 0.866666674 : f32
    %48 = vector.broadcast %cst_44 : f32 to vector<8x16xf32>
    %49 = arith.mulf %48, %10 : vector<8x16xf32>
    %50 = arith.addf %47, %49 : vector<8x16xf32>
    %cst_45 = arith.constant 0.666666686 : f32
    %51 = vector.broadcast %cst_45 : f32 to vector<8x16xf32>
    %52 = arith.mulf %51, %10 : vector<8x16xf32>
    %cst_46 = arith.constant 0.333333343 : f32
    %53 = vector.broadcast %cst_46 : f32 to vector<8x16xf32>
    %54 = arith.mulf %53, %13 : vector<8x16xf32>
    %55 = arith.addf %52, %54 : vector<8x16xf32>
    %cst_47 = arith.constant 2.000000e-01 : f32
    %56 = vector.broadcast %cst_47 : f32 to vector<8x16xf32>
    %57 = arith.mulf %56, %10 : vector<8x16xf32>
    %cst_48 = arith.constant 8.000000e-01 : f32
    %58 = vector.broadcast %cst_48 : f32 to vector<8x16xf32>
    %59 = arith.mulf %58, %13 : vector<8x16xf32>
    %60 = arith.addf %57, %59 : vector<8x16xf32>
    %cst_49 = arith.constant 0.733333349 : f32
    %61 = vector.broadcast %cst_49 : f32 to vector<8x16xf32>
    %62 = arith.mulf %61, %13 : vector<8x16xf32>
    %cst_50 = arith.constant 0.266666681 : f32
    %63 = vector.broadcast %cst_50 : f32 to vector<8x16xf32>
    %64 = arith.mulf %63, %16 : vector<8x16xf32>
    %65 = arith.addf %62, %64 : vector<8x16xf32>
    %cst_51 = arith.constant 0.266666681 : f32
    %66 = vector.broadcast %cst_51 : f32 to vector<8x16xf32>
    %67 = arith.mulf %66, %13 : vector<8x16xf32>
    %cst_52 = arith.constant 0.733333349 : f32
    %68 = vector.broadcast %cst_52 : f32 to vector<8x16xf32>
    %69 = arith.mulf %68, %16 : vector<8x16xf32>
    %70 = arith.addf %67, %69 : vector<8x16xf32>
    %cst_53 = arith.constant 8.000000e-01 : f32
    %71 = vector.broadcast %cst_53 : f32 to vector<8x16xf32>
    %72 = arith.mulf %71, %16 : vector<8x16xf32>
    %cst_54 = arith.constant 2.000000e-01 : f32
    %73 = vector.broadcast %cst_54 : f32 to vector<8x16xf32>
    %74 = arith.mulf %73, %19 : vector<8x16xf32>
    %75 = arith.addf %72, %74 : vector<8x16xf32>
    %cst_55 = arith.constant 0.333333343 : f32
    %76 = vector.broadcast %cst_55 : f32 to vector<8x16xf32>
    %77 = arith.mulf %76, %16 : vector<8x16xf32>
    %cst_56 = arith.constant 0.666666686 : f32
    %78 = vector.broadcast %cst_56 : f32 to vector<8x16xf32>
    %79 = arith.mulf %78, %19 : vector<8x16xf32>
    %80 = arith.addf %77, %79 : vector<8x16xf32>
    %cst_57 = arith.constant 0.866666674 : f32
    %81 = vector.broadcast %cst_57 : f32 to vector<8x16xf32>
    %82 = arith.mulf %81, %19 : vector<8x16xf32>
    %cst_58 = arith.constant 0.13333334 : f32
    %83 = vector.broadcast %cst_58 : f32 to vector<8x16xf32>
    %84 = arith.mulf %83, %22 : vector<8x16xf32>
    %85 = arith.addf %82, %84 : vector<8x16xf32>
    %cst_59 = arith.constant 4.000000e-01 : f32
    %86 = vector.broadcast %cst_59 : f32 to vector<8x16xf32>
    %87 = arith.mulf %86, %19 : vector<8x16xf32>
    %cst_60 = arith.constant 6.000000e-01 : f32
    %88 = vector.broadcast %cst_60 : f32 to vector<8x16xf32>
    %89 = arith.mulf %88, %22 : vector<8x16xf32>
    %90 = arith.addf %87, %89 : vector<8x16xf32>
    %cst_61 = arith.constant 0.933333337 : f32
    %91 = vector.broadcast %cst_61 : f32 to vector<8x16xf32>
    %92 = arith.mulf %91, %22 : vector<8x16xf32>
    %cst_62 = arith.constant 0.0666666701 : f32
    %93 = vector.broadcast %cst_62 : f32 to vector<8x16xf32>
    %94 = arith.mulf %93, %25 : vector<8x16xf32>
    %95 = arith.addf %92, %94 : vector<8x16xf32>
    %cst_63 = arith.constant 0.466666669 : f32
    %96 = vector.broadcast %cst_63 : f32 to vector<8x16xf32>
    %97 = arith.mulf %96, %22 : vector<8x16xf32>
    %cst_64 = arith.constant 0.533333361 : f32
    %98 = vector.broadcast %cst_64 : f32 to vector<8x16xf32>
    %99 = arith.mulf %98, %25 : vector<8x16xf32>
    %100 = arith.addf %97, %99 : vector<8x16xf32>
    %cst_65 = arith.constant 1.000000e+00 : f32
    %101 = vector.broadcast %cst_65 : f32 to vector<8x16xf32>
    %102 = arith.mulf %101, %25 : vector<8x16xf32>
    %cst_66 = arith.constant 0.000000e+00 : f32
    %103 = vector.broadcast %cst_66 : f32 to vector<8x16xf32>
    %104 = arith.mulf %103, %25 : vector<8x16xf32>
    %105 = arith.addf %102, %104 : vector<8x16xf32>
    %106 = tpu.concatenate %30, %35, %40, %45, %50, %55, %60, %65, %70, %75, %80, %85, %90, %95, %100, %105 in 1 : vector<8x16xf32>, vector<8x16xf32>, vector<8x16xf32>, vector<8x16xf32>, vector<8x16xf32>, vector<8x16xf32>, vector<8x16xf32>, vector<8x16xf32>, vector<8x16xf32>, vector<8x16xf32>, vector<8x16xf32>, vector<8x16xf32>, vector<8x16xf32>, vector<8x16xf32>, vector<8x16xf32>, vector<8x16xf32> -> vector<8x256xf32>
    %107 = arith.truncf %106 : vector<8x256xf32> to vector<8x256xbf16>
    %c0_67 = arith.constant 0 : index
    %c0_68 = arith.constant 0 : index
    %c0_69 = arith.constant 0 : index
    %108 = vector.load %arg2[%c0_67, %c0_68, %c0_69] : memref<1x4x256xbf16, #tpu.memory_space<vmem>>, vector<1x4x256xbf16>
    %109 = vector.shape_cast %108 : vector<1x4x256xbf16> to vector<4x256xbf16>
    %c0_70 = arith.constant 0 : index
    %c0_71 = arith.constant 0 : index
    %110 = vector.load %arg5[%c0_70, %c0_71] : memref<72x4xbf16, #tpu.memory_space<vmem>>, vector<72x4xbf16>
    %cst_72 = arith.constant dense<0.000000e+00> : vector<72x256xf32>
    %111 = tpu.matmul %110, %109, %cst_72 {dimension_numbers = #tpu.dot_dimension_numbers<[1], [0], [0], [1], [0, 0, 1, 1], [], []>} : vector<72x4xbf16>, vector<4x256xbf16>, vector<72x256xf32> -> vector<72x256xf32>
    %c0_73 = arith.constant 0 : index
    %c0_74 = arith.constant 0 : index
    %112 = vector.load %arg6[%c0_73, %c0_74] : memref<72x8xbf16, #tpu.memory_space<vmem>>, vector<72x8xbf16>
    %cst_75 = arith.constant dense<0.000000e+00> : vector<72x256xf32>
    %113 = tpu.matmul %112, %107, %cst_75 {dimension_numbers = #tpu.dot_dimension_numbers<[1], [0], [0], [1], [0, 0, 1, 1], [], []>} : vector<72x8xbf16>, vector<8x256xbf16>, vector<72x256xf32> -> vector<72x256xf32>
    %114 = arith.addf %111, %113 : vector<72x256xf32>
    %c0_76 = arith.constant 0 : index
    %c0_77 = arith.constant 0 : index
    %115 = vector.load %arg7[%c0_76, %c0_77] : memref<8x1xf32, #tpu.memory_space<vmem>>, vector<8x1xf32>
    %cst_78 = arith.constant 0.000000e+00 : f32
    %116 = vector.broadcast %cst_78 : f32 to vector<72x17xf32>
    %117 = tpu.concatenate %116, %114, %116 in 1 : vector<72x17xf32>, vector<72x256xf32>, vector<72x17xf32> -> vector<72x290xf32>
    %cst_79 = arith.constant 0.000000e+00 : f32
    %118 = vector.broadcast %cst_79 : f32 to vector<8x256xf32>
    %119 = vector.extract_strided_slice %117 {offsets = [0, 0], sizes = [8, 256], strides = [1, 1]} : vector<72x290xf32> to vector<8x256xf32>
    %120 = vector.extract_strided_slice %0 {offsets = [0, 0], sizes = [1, 256], strides = [1, 1]} : vector<9x256xf32> to vector<1x256xf32>
    %121 = vector.broadcast %120 : vector<1x256xf32> to vector<8x256xf32>
    %122 = arith.mulf %119, %121 : vector<8x256xf32>
    %123 = arith.addf %118, %122 : vector<8x256xf32>
    %124 = vector.extract_strided_slice %117 {offsets = [8, 1], sizes = [8, 256], strides = [1, 1]} : vector<72x290xf32> to vector<8x256xf32>
    %125 = vector.extract_strided_slice %0 {offsets = [1, 0], sizes = [1, 256], strides = [1, 1]} : vector<9x256xf32> to vector<1x256xf32>
    %126 = vector.broadcast %125 : vector<1x256xf32> to vector<8x256xf32>
    %127 = arith.mulf %124, %126 : vector<8x256xf32>
    %128 = arith.addf %123, %127 : vector<8x256xf32>
    %129 = vector.extract_strided_slice %117 {offsets = [16, 2], sizes = [8, 256], strides = [1, 1]} : vector<72x290xf32> to vector<8x256xf32>
    %130 = vector.extract_strided_slice %0 {offsets = [2, 0], sizes = [1, 256], strides = [1, 1]} : vector<9x256xf32> to vector<1x256xf32>
    %131 = vector.broadcast %130 : vector<1x256xf32> to vector<8x256xf32>
    %132 = arith.mulf %129, %131 : vector<8x256xf32>
    %133 = arith.addf %128, %132 : vector<8x256xf32>
    %134 = vector.extract_strided_slice %117 {offsets = [24, 16], sizes = [8, 256], strides = [1, 1]} : vector<72x290xf32> to vector<8x256xf32>
    %135 = vector.extract_strided_slice %0 {offsets = [3, 0], sizes = [1, 256], strides = [1, 1]} : vector<9x256xf32> to vector<1x256xf32>
    %136 = vector.broadcast %135 : vector<1x256xf32> to vector<8x256xf32>
    %137 = arith.mulf %134, %136 : vector<8x256xf32>
    %138 = arith.addf %133, %137 : vector<8x256xf32>
    %139 = vector.extract_strided_slice %117 {offsets = [32, 17], sizes = [8, 256], strides = [1, 1]} : vector<72x290xf32> to vector<8x256xf32>
    %140 = vector.extract_strided_slice %0 {offsets = [4, 0], sizes = [1, 256], strides = [1, 1]} : vector<9x256xf32> to vector<1x256xf32>
    %141 = vector.broadcast %140 : vector<1x256xf32> to vector<8x256xf32>
    %142 = arith.mulf %139, %141 : vector<8x256xf32>
    %143 = arith.addf %138, %142 : vector<8x256xf32>
    %144 = vector.extract_strided_slice %117 {offsets = [40, 18], sizes = [8, 256], strides = [1, 1]} : vector<72x290xf32> to vector<8x256xf32>
    %145 = vector.extract_strided_slice %0 {offsets = [5, 0], sizes = [1, 256], strides = [1, 1]} : vector<9x256xf32> to vector<1x256xf32>
    %146 = vector.broadcast %145 : vector<1x256xf32> to vector<8x256xf32>
    %147 = arith.mulf %144, %146 : vector<8x256xf32>
    %148 = arith.addf %143, %147 : vector<8x256xf32>
    %149 = vector.extract_strided_slice %117 {offsets = [48, 32], sizes = [8, 256], strides = [1, 1]} : vector<72x290xf32> to vector<8x256xf32>
    %150 = vector.extract_strided_slice %0 {offsets = [6, 0], sizes = [1, 256], strides = [1, 1]} : vector<9x256xf32> to vector<1x256xf32>
    %151 = vector.broadcast %150 : vector<1x256xf32> to vector<8x256xf32>
    %152 = arith.mulf %149, %151 : vector<8x256xf32>
    %153 = arith.addf %148, %152 : vector<8x256xf32>
    %154 = vector.extract_strided_slice %117 {offsets = [56, 33], sizes = [8, 256], strides = [1, 1]} : vector<72x290xf32> to vector<8x256xf32>
    %155 = vector.extract_strided_slice %0 {offsets = [7, 0], sizes = [1, 256], strides = [1, 1]} : vector<9x256xf32> to vector<1x256xf32>
    %156 = vector.broadcast %155 : vector<1x256xf32> to vector<8x256xf32>
    %157 = arith.mulf %154, %156 : vector<8x256xf32>
    %158 = arith.addf %153, %157 : vector<8x256xf32>
    %159 = vector.extract_strided_slice %117 {offsets = [64, 34], sizes = [8, 256], strides = [1, 1]} : vector<72x290xf32> to vector<8x256xf32>
    %160 = vector.extract_strided_slice %0 {offsets = [8, 0], sizes = [1, 256], strides = [1, 1]} : vector<9x256xf32> to vector<1x256xf32>
    %161 = vector.broadcast %160 : vector<1x256xf32> to vector<8x256xf32>
    %162 = arith.mulf %159, %161 : vector<8x256xf32>
    %163 = arith.addf %158, %162 : vector<8x256xf32>
    %164 = vector.broadcast %115 : vector<8x1xf32> to vector<8x256xf32>
    %165 = arith.addf %163, %164 : vector<8x256xf32>
    %cst_80 = arith.constant 0.000000e+00 : f32
    %166 = vector.broadcast %cst_80 : f32 to vector<8x256xf32>
    %167 = arith.maximumf %165, %166 : vector<8x256xf32>
    %c0_81 = arith.constant 0 : index
    %c0_82 = arith.constant 0 : index
    %168 = vector.load %arg8[%c0_81, %c0_82] : memref<72x8xbf16, #tpu.memory_space<vmem>>, vector<72x8xbf16>
    %169 = arith.truncf %167 : vector<8x256xf32> to vector<8x256xbf16>
    %cst_83 = arith.constant dense<0.000000e+00> : vector<72x256xf32>
    %170 = tpu.matmul %168, %169, %cst_83 {dimension_numbers = #tpu.dot_dimension_numbers<[1], [0], [0], [1], [0, 0, 1, 1], [], []>} : vector<72x8xbf16>, vector<8x256xbf16>, vector<72x256xf32> -> vector<72x256xf32>
    %c0_84 = arith.constant 0 : index
    %c0_85 = arith.constant 0 : index
    %171 = vector.load %arg9[%c0_84, %c0_85] : memref<8x1xf32, #tpu.memory_space<vmem>>, vector<8x1xf32>
    %cst_86 = arith.constant 0.000000e+00 : f32
    %172 = vector.broadcast %cst_86 : f32 to vector<72x17xf32>
    %173 = tpu.concatenate %172, %170, %172 in 1 : vector<72x17xf32>, vector<72x256xf32>, vector<72x17xf32> -> vector<72x290xf32>
    %cst_87 = arith.constant 0.000000e+00 : f32
    %174 = vector.broadcast %cst_87 : f32 to vector<8x256xf32>
    %175 = vector.extract_strided_slice %173 {offsets = [0, 0], sizes = [8, 256], strides = [1, 1]} : vector<72x290xf32> to vector<8x256xf32>
    %176 = vector.extract_strided_slice %0 {offsets = [0, 0], sizes = [1, 256], strides = [1, 1]} : vector<9x256xf32> to vector<1x256xf32>
    %177 = vector.broadcast %176 : vector<1x256xf32> to vector<8x256xf32>
    %178 = arith.mulf %175, %177 : vector<8x256xf32>
    %179 = arith.addf %174, %178 : vector<8x256xf32>
    %180 = vector.extract_strided_slice %173 {offsets = [8, 1], sizes = [8, 256], strides = [1, 1]} : vector<72x290xf32> to vector<8x256xf32>
    %181 = vector.extract_strided_slice %0 {offsets = [1, 0], sizes = [1, 256], strides = [1, 1]} : vector<9x256xf32> to vector<1x256xf32>
    %182 = vector.broadcast %181 : vector<1x256xf32> to vector<8x256xf32>
    %183 = arith.mulf %180, %182 : vector<8x256xf32>
    %184 = arith.addf %179, %183 : vector<8x256xf32>
    %185 = vector.extract_strided_slice %173 {offsets = [16, 2], sizes = [8, 256], strides = [1, 1]} : vector<72x290xf32> to vector<8x256xf32>
    %186 = vector.extract_strided_slice %0 {offsets = [2, 0], sizes = [1, 256], strides = [1, 1]} : vector<9x256xf32> to vector<1x256xf32>
    %187 = vector.broadcast %186 : vector<1x256xf32> to vector<8x256xf32>
    %188 = arith.mulf %185, %187 : vector<8x256xf32>
    %189 = arith.addf %184, %188 : vector<8x256xf32>
    %190 = vector.extract_strided_slice %173 {offsets = [24, 16], sizes = [8, 256], strides = [1, 1]} : vector<72x290xf32> to vector<8x256xf32>
    %191 = vector.extract_strided_slice %0 {offsets = [3, 0], sizes = [1, 256], strides = [1, 1]} : vector<9x256xf32> to vector<1x256xf32>
    %192 = vector.broadcast %191 : vector<1x256xf32> to vector<8x256xf32>
    %193 = arith.mulf %190, %192 : vector<8x256xf32>
    %194 = arith.addf %189, %193 : vector<8x256xf32>
    %195 = vector.extract_strided_slice %173 {offsets = [32, 17], sizes = [8, 256], strides = [1, 1]} : vector<72x290xf32> to vector<8x256xf32>
    %196 = vector.extract_strided_slice %0 {offsets = [4, 0], sizes = [1, 256], strides = [1, 1]} : vector<9x256xf32> to vector<1x256xf32>
    %197 = vector.broadcast %196 : vector<1x256xf32> to vector<8x256xf32>
    %198 = arith.mulf %195, %197 : vector<8x256xf32>
    %199 = arith.addf %194, %198 : vector<8x256xf32>
    %200 = vector.extract_strided_slice %173 {offsets = [40, 18], sizes = [8, 256], strides = [1, 1]} : vector<72x290xf32> to vector<8x256xf32>
    %201 = vector.extract_strided_slice %0 {offsets = [5, 0], sizes = [1, 256], strides = [1, 1]} : vector<9x256xf32> to vector<1x256xf32>
    %202 = vector.broadcast %201 : vector<1x256xf32> to vector<8x256xf32>
    %203 = arith.mulf %200, %202 : vector<8x256xf32>
    %204 = arith.addf %199, %203 : vector<8x256xf32>
    %205 = vector.extract_strided_slice %173 {offsets = [48, 32], sizes = [8, 256], strides = [1, 1]} : vector<72x290xf32> to vector<8x256xf32>
    %206 = vector.extract_strided_slice %0 {offsets = [6, 0], sizes = [1, 256], strides = [1, 1]} : vector<9x256xf32> to vector<1x256xf32>
    %207 = vector.broadcast %206 : vector<1x256xf32> to vector<8x256xf32>
    %208 = arith.mulf %205, %207 : vector<8x256xf32>
    %209 = arith.addf %204, %208 : vector<8x256xf32>
    %210 = vector.extract_strided_slice %173 {offsets = [56, 33], sizes = [8, 256], strides = [1, 1]} : vector<72x290xf32> to vector<8x256xf32>
    %211 = vector.extract_strided_slice %0 {offsets = [7, 0], sizes = [1, 256], strides = [1, 1]} : vector<9x256xf32> to vector<1x256xf32>
    %212 = vector.broadcast %211 : vector<1x256xf32> to vector<8x256xf32>
    %213 = arith.mulf %210, %212 : vector<8x256xf32>
    %214 = arith.addf %209, %213 : vector<8x256xf32>
    %215 = vector.extract_strided_slice %173 {offsets = [64, 34], sizes = [8, 256], strides = [1, 1]} : vector<72x290xf32> to vector<8x256xf32>
    %216 = vector.extract_strided_slice %0 {offsets = [8, 0], sizes = [1, 256], strides = [1, 1]} : vector<9x256xf32> to vector<1x256xf32>
    %217 = vector.broadcast %216 : vector<1x256xf32> to vector<8x256xf32>
    %218 = arith.mulf %215, %217 : vector<8x256xf32>
    %219 = arith.addf %214, %218 : vector<8x256xf32>
    %220 = vector.broadcast %171 : vector<8x1xf32> to vector<8x256xf32>
    %221 = arith.addf %219, %220 : vector<8x256xf32>
    %cst_88 = arith.constant 0.000000e+00 : f32
    %222 = vector.broadcast %cst_88 : f32 to vector<8x256xf32>
    %223 = arith.maximumf %221, %222 : vector<8x256xf32>
    %c0_89 = arith.constant 0 : index
    %c0_90 = arith.constant 0 : index
    %c0_91 = arith.constant 0 : index
    %224 = vector.load %arg10[%c0_89, %c0_90, %c0_91] : memref<1x8x256xf32, #tpu.memory_space<vmem>>, vector<1x8x256xf32>
    %225 = vector.shape_cast %224 : vector<1x8x256xf32> to vector<8x256xf32>
    %226 = vector.shape_cast %223 : vector<8x256xf32> to vector<1x8x256xf32>
    tpu.vector_store %arg10[%c0_89, %c0_90, %c0_91], %226 {strides = array<i32>} : memref<1x8x256xf32, #tpu.memory_space<vmem>>, vector<1x8x256xf32>,
    return
  }
  func.func @transform_0(%arg0: i32) -> (i32, i32, i32, i32) {
    %c0_i32 = arith.constant 0 : i32
    %c0_i32_0 = arith.constant 0 : i32
    %c0_i32_1 = arith.constant 0 : i32
    %c0_i32_2 = arith.constant 0 : i32
    return %arg0, %c0_i32, %c0_i32_0, %c0_i32_1 : i32, i32, i32, i32
  }
  func.func @transform_1(%arg0: i32) -> (i32, i32, i32) {
    %c0_i32 = arith.constant 0 : i32
    %c0_i32_0 = arith.constant 0 : i32
    %c0_i32_1 = arith.constant 0 : i32
    return %arg0, %c0_i32, %c0_i32_0 : i32, i32, i32
  }
  func.func @transform_2(%arg0: i32) -> (i32, i32) {
    %c0_i32 = arith.constant 0 : i32
    %c0_i32_0 = arith.constant 0 : i32
    %c0_i32_1 = arith.constant 0 : i32
    return %c0_i32, %c0_i32_0 : i32, i32
  }
  func.func @transform_3(%arg0: i32) -> (i32, i32) {
    %c0_i32 = arith.constant 0 : i32
    %c0_i32_0 = arith.constant 0 : i32
    %c0_i32_1 = arith.constant 0 : i32
    return %c0_i32, %c0_i32_0 : i32, i32
  }
  func.func @transform_4(%arg0: i32) -> (i32, i32) {
    %c0_i32 = arith.constant 0 : i32
    %c0_i32_0 = arith.constant 0 : i32
    %c0_i32_1 = arith.constant 0 : i32
    return %c0_i32, %c0_i32_0 : i32, i32
  }
  func.func @transform_5(%arg0: i32) -> (i32, i32) {
    %c0_i32 = arith.constant 0 : i32
    %c0_i32_0 = arith.constant 0 : i32
    %c0_i32_1 = arith.constant 0 : i32
    return %c0_i32, %c0_i32_0 : i32, i32
  }
  func.func @transform_6(%arg0: i32) -> (i32, i32) {
    %c0_i32 = arith.constant 0 : i32
    %c0_i32_0 = arith.constant 0 : i32
    %c0_i32_1 = arith.constant 0 : i32
    return %c0_i32, %c0_i32_0 : i32, i32
  }
  func.func @transform_7(%arg0: i32) -> (i32, i32) {
    %c0_i32 = arith.constant 0 : i32
    %c0_i32_0 = arith.constant 0 : i32
    %c0_i32_1 = arith.constant 0 : i32
    return %c0_i32, %c0_i32_0 : i32, i32
  }
  func.func @transform_8(%arg0: i32) -> (i32, i32) {
    %c0_i32 = arith.constant 0 : i32
    %c0_i32_0 = arith.constant 0 : i32
    %c0_i32_1 = arith.constant 0 : i32
    return %c0_i32, %c0_i32_0 : i32, i32
  }
  func.func @transform_9(%arg0: i32) -> (i32, i32, i32) {
    %c0_i32 = arith.constant 0 : i32
    %c0_i32_0 = arith.constant 0 : i32
    %c0_i32_1 = arith.constant 0 : i32
    return %arg0, %c0_i32, %c0_i32_0 : i32, i32, i32
  }
}

</mosaic_0001>

<llo_original>
// kernel: tpu_custom_call.1
$region0: #{tpu_custom_call.1}
  #allocation0 [shape = 'u32[]', space=smem, size = 0x4, offset = 0x4, fixed_abs, tag = 'smem constant byte address 0x4 - core index']
  #allocation1 [shape = 'u32[144,128]{1,0:T(1,128)}', space=vmem, size = 0x12000, scoped, tag = 'internal scratch']
  %s0 = inlined_call_operand.vmem [shape: bf16[2,8,8,8], index: 0, kind: input, shape index: {}]
  %s1 = inlined_call_operand.vmem [shape: bf16[2,4,256], index: 1, kind: input, shape index: {}]
  %s2 = inlined_call_operand.vmem [shape: bf16[8,16], index: 2, kind: input, shape index: {}]
  %s3 = inlined_call_operand.vmem [shape: f32[9,256], index: 3, kind: input, shape index: {}]
  %s4 = inlined_call_operand.vmem [shape: bf16[72,4], index: 4, kind: input, shape index: {}]
  %s5 = inlined_call_operand.vmem [shape: bf16[72,8], index: 5, kind: input, shape index: {}]
  %s6 = inlined_call_operand.vmem [shape: f32[8,1], index: 6, kind: input, shape index: {}]
  %s7 = inlined_call_operand.vmem [shape: bf16[72,8], index: 7, kind: input, shape index: {}]
  %s8 = inlined_call_operand.vmem [shape: f32[8,1], index: 8, kind: input, shape index: {}]
  %s9 = inlined_call_operand.hbm [shape: f32[2,8,256], index: 9, kind: output, shape index: {}]
  %s10 = sld [smem:[#allocation0]]
  $region69: #{tpu_custom_call.1} parent=0
    _
  %s12 = ssub.s32 1, %s10
  %s13 = scalar_select 0, %s12, %s10
  $region1: #{tpu_custom_call.1} parent=0
    #allocation2 [shape = 'u8[16384]{0}', space=vmem, size = 0x4000, scoped, tag = 'output window, operand 0']
    #allocation3 [shape = 's32[2]{0}', space=sflag, size = 0x8, scoped, tag = 'scoped memory for tpu_custom_call.1']
    %14 = vsyncpa [#allocation3], 0
    %s15 = scalar_lea.sflag [#allocation3], 1
    %16 = vsyncpa %s15, 0
    loop: start=0, step=1, limit=4
    $region2: #{tpu_custom_call.1} parent=1 // loop_pre_header
      _
    $region3: #{tpu_custom_call.1} parent=1 // loop_header
      %s18 = sphi 0, %s22
      %p19 = scmp.ge.s32.totalorder %s18, 4
      %s28 = sphi 0, %s30
      %s31 = sphi 0, %s28
      %s32 = sphi 0, %s31
      %s48 = sphi 0, %s32
      %s54 = sphi 0, %s56
      %s57 = sphi 0, %s54
      %s58 = sphi 0, %s57
      %s74 = sphi 0, %s58
      %s78 = sphi 0, %s78
      %s80 = sphi 0, %s78
      %s81 = sphi 0, %s80
      %s95 = sphi 0, %s81
      %s99 = sphi 0, %s99
      %s101 = sphi 0, %s99
      %s102 = sphi 0, %s101
      %s116 = sphi 0, %s102
      %s120 = sphi 0, %s120
      %s122 = sphi 0, %s120
      %s123 = sphi 0, %s122
      %s137 = sphi 0, %s123
      %s141 = sphi 0, %s141
      %s143 = sphi 0, %s141
      %s144 = sphi 0, %s143
      %s158 = sphi 0, %s144
      %s162 = sphi 0, %s162
      %s164 = sphi 0, %s162
      %s165 = sphi 0, %s164
      %s179 = sphi 0, %s165
      %s183 = sphi 0, %s183
      %s185 = sphi 0, %s183
      %s186 = sphi 0, %s185
      %s200 = sphi 0, %s186
      %s204 = sphi 0, %s204
      %s206 = sphi 0, %s204
      %s207 = sphi 0, %s206
      %s221 = sphi 0, %s207
      %s227 = sphi 0, %s229
      %s230 = sphi 0, %s227
      %s231 = sphi 0, %s230
      %s247 = sphi 0, %s231
    $region4: #{tpu_custom_call.1} parent=1 // loop_header_branch
      %21 = sbr.rel (%p19) target = $region8
    $region5: #{tpu_custom_call.1} parent=1 // loop_body
      %s23 = ssub.s32 %s18, 1
      %s24 = ssub.s32 %s18, 2
      %s25 = sadd.s32 %s18, 1
      %s26 = ssub.s32 %s18, %s25
      %p27 = scmp.eq.s32.totalorder %s26, 0
      %s29 = sadd.s32 %s28, 1
      %s30 = scalar_select %p27, %s28, %s29
      %p33 = pneg %p27
      %p34 = scmp.eq.s32.totalorder %s18, 1
      %p35 = por %p33, %p34
      %p36 = scmp.ne.s32.totalorder %s28, %s31
      %p37 = scmp.eq.s32.totalorder %s18, 0
      %p38 = por %p36, %p37
      %p39 = scmp.ne.s32.totalorder %s28, %s31
      %p40 = scmp.eq.s32.totalorder %s23, 1
      %p41 = por %p39, %p40
      %p42 = scmp.ne.s32.totalorder %s31, %s32
      %p43 = scmp.eq.s32.totalorder %s23, 0
      %p44 = por %p42, %p43
      %p45 = scmp.ne.s32.totalorder %s31, %s32
      %p46 = scmp.eq.s32.totalorder %s24, 1
      %p47 = por %p45, %p46
      %p49 = scmp.ne.s32.totalorder %s32, %s48
      %p50 = scmp.eq.s32.totalorder %s24, 0
      %p51 = por %p49, %p50
      %s52 = ssub.s32 %s18, %s25
      %p53 = scmp.eq.s32.totalorder %s52, 0
      %s55 = sadd.s32 %s54, 1
      %s56 = scalar_select %p53, %s54, %s55
      %p59 = pneg %p53
      %p60 = scmp.eq.s32.totalorder %s18, 1
      %p61 = por %p59, %p60
      %p62 = scmp.ne.s32.totalorder %s54, %s57
      %p63 = scmp.eq.s32.totalorder %s18, 0
      %p64 = por %p62, %p63
      %p65 = scmp.ne.s32.totalorder %s54, %s57
      %p66 = scmp.eq.s32.totalorder %s23, 1
      %p67 = por %p65, %p66
      %p68 = scmp.ne.s32.totalorder %s57, %s58
      %p69 = scmp.eq.s32.totalorder %s23, 0
      %p70 = por %p68, %p69
      %p71 = scmp.ne.s32.totalorder %s57, %s58
      %p72 = scmp.eq.s32.totalorder %s24, 1
      %p73 = por %p71, %p72
      %p75 = scmp.ne.s32.totalorder %s58, %s74
      %p76 = scmp.eq.s32.totalorder %s24, 0
      %p77 = por %p75, %p76
      %s79 = sadd.s32 %s78, 1
      %p82 = scmp.eq.s32.totalorder %s18, 1
      %p83 = scmp.ne.s32.totalorder %s78, %s80
      %p84 = scmp.eq.s32.totalorder %s18, 0
      %p85 = por %p83, %p84
      %p86 = scmp.ne.s32.totalorder %s78, %s80
      %p87 = scmp.eq.s32.totalorder %s23, 1
      %p88 = por %p86, %p87
      %p89 = scmp.ne.s32.totalorder %s80, %s81
      %p90 = scmp.eq.s32.totalorder %s23, 0
      %p91 = por %p89, %p90
      %p92 = scmp.ne.s32.totalorder %s80, %s81
      %p93 = scmp.eq.s32.totalorder %s24, 1
      %p94 = por %p92, %p93
      %p96 = scmp.ne.s32.totalorder %s81, %s95
      %p97 = scmp.eq.s32.totalorder %s24, 0
      %p98 = por %p96, %p97
      %s100 = sadd.s32 %s99, 1
      %p103 = scmp.eq.s32.totalorder %s18, 1
      %p104 = scmp.ne.s32.totalorder %s99, %s101
      %p105 = scmp.eq.s32.totalorder %s18, 0
      %p106 = por %p104, %p105
      %p107 = scmp.ne.s32.totalorder %s99, %s101
      %p108 = scmp.eq.s32.totalorder %s23, 1
      %p109 = por %p107, %p108
      %p110 = scmp.ne.s32.totalorder %s101, %s102
      %p111 = scmp.eq.s32.totalorder %s23, 0
      %p112 = por %p110, %p111
      %p113 = scmp.ne.s32.totalorder %s101, %s102
      %p114 = scmp.eq.s32.totalorder %s24, 1
      %p115 = por %p113, %p114
      %p117 = scmp.ne.s32.totalorder %s102, %s116
      %p118 = scmp.eq.s32.totalorder %s24, 0
      %p119 = por %p117, %p118
      %s121 = sadd.s32 %s120, 1
      %p124 = scmp.eq.s32.totalorder %s18, 1
      %p125 = scmp.ne.s32.totalorder %s120, %s122
      %p126 = scmp.eq.s32.totalorder %s18, 0
      %p127 = por %p125, %p126
      %p128 = scmp.ne.s32.totalorder %s120, %s122
      %p129 = scmp.eq.s32.totalorder %s23, 1
      %p130 = por %p128, %p129
      %p131 = scmp.ne.s32.totalorder %s122, %s123
      %p132 = scmp.eq.s32.totalorder %s23, 0
      %p133 = por %p131, %p132
      %p134 = scmp.ne.s32.totalorder %s122, %s123
      %p135 = scmp.eq.s32.totalorder %s24, 1
      %p136 = por %p134, %p135
      %p138 = scmp.ne.s32.totalorder %s123, %s137
      %p139 = scmp.eq.s32.totalorder %s24, 0
      %p140 = por %p138, %p139
      %s142 = sadd.s32 %s141, 1
      %p145 = scmp.eq.s32.totalorder %s18, 1
      %p146 = scmp.ne.s32.totalorder %s141, %s143
      %p147 = scmp.eq.s32.totalorder %s18, 0
      %p148 = por %p146, %p147
      %p149 = scmp.ne.s32.totalorder %s141, %s143
      %p150 = scmp.eq.s32.totalorder %s23, 1
      %p151 = por %p149, %p150
      %p152 = scmp.ne.s32.totalorder %s143, %s144
      %p153 = scmp.eq.s32.totalorder %s23, 0
      %p154 = por %p152, %p153
      %p155 = scmp.ne.s32.totalorder %s143, %s144
      %p156 = scmp.eq.s32.totalorder %s24, 1
      %p157 = por %p155, %p156
      %p159 = scmp.ne.s32.totalorder %s144, %s158
      %p160 = scmp.eq.s32.totalorder %s24, 0
      %p161 = por %p159, %p160
      %s163 = sadd.s32 %s162, 1
      %p166 = scmp.eq.s32.totalorder %s18, 1
      %p167 = scmp.ne.s32.totalorder %s162, %s164
      %p168 = scmp.eq.s32.totalorder %s18, 0
      %p169 = por %p167, %p168
      %p170 = scmp.ne.s32.totalorder %s162, %s164
      %p171 = scmp.eq.s32.totalorder %s23, 1
      %p172 = por %p170, %p171
      %p173 = scmp.ne.s32.totalorder %s164, %s165
      %p174 = scmp.eq.s32.totalorder %s23, 0
      %p175 = por %p173, %p174
      %p176 = scmp.ne.s32.totalorder %s164, %s165
      %p177 = scmp.eq.s32.totalorder %s24, 1
      %p178 = por %p176, %p177
      %p180 = scmp.ne.s32.totalorder %s165, %s179
      %p181 = scmp.eq.s32.totalorder %s24, 0
      %p182 = por %p180, %p181
      %s184 = sadd.s32 %s183, 1
      %p187 = scmp.eq.s32.totalorder %s18, 1
      %p188 = scmp.ne.s32.totalorder %s183, %s185
      %p189 = scmp.eq.s32.totalorder %s18, 0
      %p190 = por %p188, %p189
      %p191 = scmp.ne.s32.totalorder %s183, %s185
      %p192 = scmp.eq.s32.totalorder %s23, 1
      %p193 = por %p191, %p192
      %p194 = scmp.ne.s32.totalorder %s185, %s186
      %p195 = scmp.eq.s32.totalorder %s23, 0
      %p196 = por %p194, %p195
      %p197 = scmp.ne.s32.totalorder %s185, %s186
      %p198 = scmp.eq.s32.totalorder %s24, 1
      %p199 = por %p197, %p198
      %p201 = scmp.ne.s32.totalorder %s186, %s200
      %p202 = scmp.eq.s32.totalorder %s24, 0
      %p203 = por %p201, %p202
      %s205 = sadd.s32 %s204, 1
      %p208 = scmp.eq.s32.totalorder %s18, 1
      %p209 = scmp.ne.s32.totalorder %s204, %s206
      %p210 = scmp.eq.s32.totalorder %s18, 0
      %p211 = por %p209, %p210
      %p212 = scmp.ne.s32.totalorder %s204, %s206
      %p213 = scmp.eq.s32.totalorder %s23, 1
      %p214 = por %p212, %p213
      %p215 = scmp.ne.s32.totalorder %s206, %s207
      %p216 = scmp.eq.s32.totalorder %s23, 0
      %p217 = por %p215, %p216
      %p218 = scmp.ne.s32.totalorder %s206, %s207
      %p219 = scmp.eq.s32.totalorder %s24, 1
      %p220 = por %p218, %p219
      %p222 = scmp.ne.s32.totalorder %s207, %s221
      %p223 = scmp.eq.s32.totalorder %s24, 0
      %p224 = por %p222, %p223
      %s225 = ssub.s32 %s18, %s25
      %p226 = scmp.eq.s32.totalorder %s225, 0
      %s228 = sadd.s32 %s227, 1
      %s229 = scalar_select %p226, %s227, %s228
      %p232 = pneg %p226
      %p233 = scmp.eq.s32.totalorder %s18, 1
      %p234 = por %p232, %p233
      %p235 = scmp.ne.s32.totalorder %s227, %s230
      %p236 = scmp.eq.s32.totalorder %s18, 0
      %p237 = por %p235, %p236
      %p238 = scmp.ne.s32.totalorder %s227, %s230
      %p239 = scmp.eq.s32.totalorder %s23, 1
      %p240 = por %p238, %p239
      %p241 = scmp.ne.s32.totalorder %s230, %s231
      %p242 = scmp.eq.s32.totalorder %s23, 0
      %p243 = por %p241, %p242
      %p244 = scmp.ne.s32.totalorder %s230, %s231
      %p245 = scmp.eq.s32.totalorder %s24, 1
      %p246 = por %p244, %p245
      %p248 = scmp.ne.s32.totalorder %s231, %s247
      %p249 = scmp.eq.s32.totalorder %s24, 0
      %p250 = por %p248, %p249
      %p251 = scmp.le.s32.totalorder 1, %s18
      %p252 = scmp.lt.s32.totalorder %s18, 3
      %p253 = pnand %p251, %p252
      %p254 = pneg %p253
      // Predicated region
      $region9: #{tpu_custom_call.1} parent=5 // pred_check
        _
      $region10: #{tpu_custom_call.1} parent=5 // pred_check_branch
        %256 = sbr.rel (%p253) target = $region12
      $region11: #{tpu_custom_call.1} parent=5 // pred_region
        %s257 = ssub.s32 %s18, 1
        // Predicated region
        $region13: #{tpu_custom_call.1} parent=11 // pred_check
          %p258 = pneg %p91
        $region14: #{tpu_custom_call.1} parent=11 // pred_check_branch
          %260 = sbr.rel (%p258) target = $region16
        $region15: #{tpu_custom_call.1} parent=11 // pred_region
          _
        $region16: #{tpu_custom_call.1} parent=11 // pred_fallthru
          _
        // Predicated region
        $region17: #{tpu_custom_call.1} parent=11 // pred_check
          %p261 = pneg %p112
        $region18: #{tpu_custom_call.1} parent=11 // pred_check_branch
          %263 = sbr.rel (%p261) target = $region20
        $region19: #{tpu_custom_call.1} parent=11 // pred_region
          _
        $region20: #{tpu_custom_call.1} parent=11 // pred_fallthru
          _
        // Predicated region
        $region21: #{tpu_custom_call.1} parent=11 // pred_check
          %p264 = pneg %p133
        $region22: #{tpu_custom_call.1} parent=11 // pred_check_branch
          %266 = sbr.rel (%p264) target = $region24
        $region23: #{tpu_custom_call.1} parent=11 // pred_region
          _
        $region24: #{tpu_custom_call.1} parent=11 // pred_fallthru
          _
        // Predicated region
        $region25: #{tpu_custom_call.1} parent=11 // pred_check
          %p267 = pneg %p154
        $region26: #{tpu_custom_call.1} parent=11 // pred_check_branch
          %269 = sbr.rel (%p267) target = $region28
        $region27: #{tpu_custom_call.1} parent=11 // pred_region
          _
        $region28: #{tpu_custom_call.1} parent=11 // pred_fallthru
          _
        // Predicated region
        $region29: #{tpu_custom_call.1} parent=11 // pred_check
          %p270 = pneg %p175
        $region30: #{tpu_custom_call.1} parent=11 // pred_check_branch
          %272 = sbr.rel (%p270) target = $region32
        $region31: #{tpu_custom_call.1} parent=11 // pred_region
          _
        $region32: #{tpu_custom_call.1} parent=11 // pred_fallthru
          _
        // Predicated region
        $region33: #{tpu_custom_call.1} parent=11 // pred_check
          %p273 = pneg %p196
        $region34: #{tpu_custom_call.1} parent=11 // pred_check_branch
          %275 = sbr.rel (%p273) target = $region36
        $region35: #{tpu_custom_call.1} parent=11 // pred_region
          _
        $region36: #{tpu_custom_call.1} parent=11 // pred_fallthru
          _
        // Predicated region
        $region37: #{tpu_custom_call.1} parent=11 // pred_check
          %p276 = pneg %p217
        $region38: #{tpu_custom_call.1} parent=11 // pred_check_branch
          %278 = sbr.rel (%p276) target = $region40
        $region39: #{tpu_custom_call.1} parent=11 // pred_region
          _
        $region40: #{tpu_custom_call.1} parent=11 // pred_fallthru
          _
      $region12: #{tpu_custom_call.1} parent=5 // pred_fallthru
        _
      %p279 = scmp.lt.s32.totalorder %s18, 2
      // Predicated region
      $region41: #{tpu_custom_call.1} parent=5 // pred_check
        %p280 = pneg %p279
      $region42: #{tpu_custom_call.1} parent=5 // pred_check_branch
        %282 = sbr.rel (%p280) target = $region44
      $region43: #{tpu_custom_call.1} parent=5 // pred_region
        // Predicated region
        $region45: #{tpu_custom_call.1} parent=43 // pred_check
          %p283 = pneg %p38
        $region46: #{tpu_custom_call.1} parent=43 // pred_check_branch
          %285 = sbr.rel (%p283) target = $region48
        $region47: #{tpu_custom_call.1} parent=43 // pred_region
          %p286 = scmp.lt.s32.totalorder %s18, 1
          %s287 = scalar_select %p286, %s18, 1
          %s288 = smul.addr %s287, 8
          %s289 = smul.addr %s288, 4
          %s290 = scalar_lea.vmem %s0, %s289
        $region48: #{tpu_custom_call.1} parent=43 // pred_fallthru
          _
        // Predicated region
        $region49: #{tpu_custom_call.1} parent=43 // pred_check
          %p291 = pneg %p64
        $region50: #{tpu_custom_call.1} parent=43 // pred_check_branch
          %293 = sbr.rel (%p291) target = $region52
        $region51: #{tpu_custom_call.1} parent=43 // pred_region
          %p294 = scmp.lt.s32.totalorder %s18, 1
          %s295 = scalar_select %p294, %s18, 1
          %s296 = smul.addr %s295, 2
          %s297 = smul.addr %s296, 2
          %s298 = scalar_lea.vmem %s1, %s297
        $region52: #{tpu_custom_call.1} parent=43 // pred_fallthru
          _
      $region44: #{tpu_custom_call.1} parent=5 // pred_fallthru
        _
      %p299 = scmp.le.s32.totalorder 1, %s18
      %p300 = scmp.lt.s32.totalorder %s18, 3
      %p301 = pnand %p299, %p300
      %p302 = pneg %p301
      // Predicated region
      $region53: #{tpu_custom_call.1} parent=5 // pred_check
        _
      $region54: #{tpu_custom_call.1} parent=5 // pred_check_branch
        %304 = sbr.rel (%p301) target = $region56
      $region55: #{tpu_custom_call.1} parent=5 // pred_region
        %s305 = ssub.s32 %s18, 1
        %p306 = scmp.lt.s32.totalorder %s23, 1
        %s307 = scalar_select %p306, %s23, 1
        %s308 = smul.addr %s307, 8
        %s309 = smul.addr %s308, 4
        %s310 = scalar_lea.vmem %s0, %s309
        %p311 = pneg %p44
        %p312 = pneg %p41
        %p313 = scmp.lt.s32.totalorder %s23, 1
        %s314 = scalar_select %p313, %s23, 1
        %s315 = smul.addr %s314, 2
        %s316 = smul.addr %s315, 2
        %s317 = scalar_lea.vmem %s1, %s316
        %p318 = pneg %p70
        %p319 = pneg %p67
        %p320 = pneg %p91
        %p321 = pneg %p88
        %p322 = pneg %p112
        %p323 = pneg %p109
        %p324 = pneg %p133
        %p325 = pneg %p130
        %p326 = pneg %p154
        %p327 = pneg %p151
        %p328 = pneg %p175
        %p329 = pneg %p172
        %p330 = pneg %p196
        %p331 = pneg %p193
        %p332 = pneg %p217
        %p333 = pneg %p214
        %p334 = pneg %p243
        %p335 = pneg %p240
        %s336 = sand.u32 %s230, 1
        %s337 = scalar_lea.sflag [#allocation3], %s336
        %s338 = sand.u32 %s230, 1
        %s339 = smul.addr %s338, 16
        %s340 = scalar_lea.vmem [#allocation2], %s339
        %p341 = scmp.lt.s32.totalorder %s23, 1
        %s342 = scalar_select %p341, %s23, 1
        %s343 = smul.addr %s342, 8
        %s344 = smul.addr %s343, 4
        %s345 = scalar_lea.vmem %s0, %s344
        %p346 = scmp.lt.s32.totalorder %s23, 1
        %s347 = scalar_select %p346, %s23, 1
        %s348 = smul.addr %s347, 2
        %s349 = smul.addr %s348, 2
        %s350 = scalar_lea.vmem %s1, %s349
        %v352 = vld [vmem:[%s3] sm:$0xff]
        %v353 = vld [vmem:[%s3 + $0x8] sm:$0xff]
        %v354 = vld [vmem:[%s3 + $0x10] sm:$0x1]
        %v355 = vld [vmem:[%s3 + $0x18] sm:$0x1]
        %v356 = vld [vmem:[%s2] sm:$0xf]
        %v357 = vld [vmem:[%s345] sm:$0xf]
        %vm358 = vcmask 64512
        %v360 = vsel %vm358, %v357, 0
        %vm362 = vcmask 1043456
        %v364 = vsel %vm362, %v356, 0
        %366 = vmatprep.subr.bf16.mxu0 0
        %367 = vmatpush1.bf16.msra.mxu0 %v364
        %368 = vmatprep.subr.bf16.mxu0 0
        %369 = vmatpush1.bf16.msra.mxu0 0
        %370 = vmatprep.subr.bf16.mxu0 0
        %371 = vmatpush1.bf16.msra.mxu0 0
        %372 = vmatprep.subr.bf16.mxu0 0
        %373 = vmatpush1.bf16.msra.mxu0 0
        %374 = vmatprep.subr.bf16.mxu0 0
        %375 = vmatpush1.bf16.msra.mxu0 0
        %376 = vmatprep.subr.bf16.mxu0 0
        %377 = vmatpush1.bf16.msra.mxu0 0
        %378 = vmatprep.subr.bf16.mxu0 0
        %379 = vmatpush1.bf16.msra.mxu0 0
        %380 = vmatprep.subr.bf16.mxu0 0
        %381 = vmatpush1.bf16.msra.mxu0 0
        %382 = vmatprep.subr.bf16.mxu0 0
        %383 = vmatpush1.bf16.msra.mxu0 0
        %384 = vmatprep.subr.bf16.mxu0 0
        %385 = vmatpush1.bf16.msra.mxu0 0
        %386 = vmatprep.subr.bf16.mxu0 0
        %387 = vmatpush1.bf16.msra.mxu0 0
        %388 = vmatprep.subr.bf16.mxu0 0
        %389 = vmatpush1.bf16.msra.mxu0 0
        %390 = vmatprep.subr.bf16.mxu0 0
        %391 = vmatpush1.bf16.msra.mxu0 0
        %392 = vmatprep.subr.bf16.mxu0 0
        %393 = vmatpush1.bf16.msra.mxu0 0
        %394 = vmatprep.subr.bf16.mxu0 0
        %395 = vmatpush1.bf16.msra.mxu0 0
        %396 = vmatprep.subr.bf16.mxu0 0
        %397 = vmatpush1.bf16.msra.mxu0 0
        %398 = vmatprep.mubr.bf16.mxu0 0
        %399 = vmatmul.mubr.bf16.gmra.mrb[0].mxu0 %v360
        %v400 = vpop.f32.mrb[0].mxu0
        %v401 = vadd.f32 0.0, %v400
        %v402 = vpop.f32.mrb[0].mxu0
        %v403 = vpop.f32.mrb[0].mxu0
        %v404 = vpop.f32.mrb[0].mxu0
        %405 = vdwg.mxu0
        %s406 = scalar_lea.vmem %s345, 4
        %v407 = vld [vmem:[%s406] sm:$0xf]
        %v409 = vsel %vm358, %v407, 0
        %411 = vmatprep.subr.bf16.mxu0 0
        %412 = vmatpush1.bf16.msra.mxu0 %v364
        %413 = vmatprep.subr.bf16.mxu0 0
        %414 = vmatpush1.bf16.msra.mxu0 0
        %415 = vmatprep.subr.bf16.mxu0 0
        %416 = vmatpush1.bf16.msra.mxu0 0
        %417 = vmatprep.subr.bf16.mxu0 0
        %418 = vmatpush1.bf16.msra.mxu0 0
        %419 = vmatprep.subr.bf16.mxu0 0
        %420 = vmatpush1.bf16.msra.mxu0 0
        %421 = vmatprep.subr.bf16.mxu0 0
        %422 = vmatpush1.bf16.msra.mxu0 0
        %423 = vmatprep.subr.bf16.mxu0 0
        %424 = vmatpush1.bf16.msra.mxu0 0
        %425 = vmatprep.subr.bf16.mxu0 0
        %426 = vmatpush1.bf16.msra.mxu0 0
        %427 = vmatprep.subr.bf16.mxu0 0
        %428 = vmatpush1.bf16.msra.mxu0 0
        %429 = vmatprep.subr.bf16.mxu0 0
        %430 = vmatpush1.bf16.msra.mxu0 0
        %431 = vmatprep.subr.bf16.mxu0 0
        %432 = vmatpush1.bf16.msra.mxu0 0
        %433 = vmatprep.subr.bf16.mxu0 0
        %434 = vmatpush1.bf16.msra.mxu0 0
        %435 = vmatprep.subr.bf16.mxu0 0
        %436 = vmatpush1.bf16.msra.mxu0 0
        %437 = vmatprep.subr.bf16.mxu0 0
        %438 = vmatpush1.bf16.msra.mxu0 0
        %439 = vmatprep.subr.bf16.mxu0 0
        %440 = vmatpush1.bf16.msra.mxu0 0
        %441 = vmatprep.subr.bf16.mxu0 0
        %442 = vmatpush1.bf16.msra.mxu0 0
        %443 = vmatprep.mubr.bf16.mxu0 0
        %444 = vmatmul.mubr.bf16.gmra.mrb[0].mxu0 %v409
        %v445 = vpop.f32.mrb[0].mxu0
        %v446 = vadd.f32 0.0, %v445
        %v447 = vpop.f32.mrb[0].mxu0
        %v448 = vpop.f32.mrb[0].mxu0
        %v449 = vpop.f32.mrb[0].mxu0
        %450 = vdwg.mxu0
        %s451 = scalar_lea.vmem %s345, 8
        %v452 = vld [vmem:[%s451] sm:$0xf]
        %v454 = vsel %vm358, %v452, 0
        %456 = vmatprep.subr.bf16.mxu0 0
        %457 = vmatpush1.bf16.msra.mxu0 %v364
        %458 = vmatprep.subr.bf16.mxu0 0
        %459 = vmatpush1.bf16.msra.mxu0 0
        %460 = vmatprep.subr.bf16.mxu0 0
        %461 = vmatpush1.bf16.msra.mxu0 0
        %462 = vmatprep.subr.bf16.mxu0 0
        %463 = vmatpush1.bf16.msra.mxu0 0
        %464 = vmatprep.subr.bf16.mxu0 0
        %465 = vmatpush1.bf16.msra.mxu0 0
        %466 = vmatprep.subr.bf16.mxu0 0
        %467 = vmatpush1.bf16.msra.mxu0 0
        %468 = vmatprep.subr.bf16.mxu0 0
        %469 = vmatpush1.bf16.msra.mxu0 0
        %470 = vmatprep.subr.bf16.mxu0 0
        %471 = vmatpush1.bf16.msra.mxu0 0
        %472 = vmatprep.subr.bf16.mxu0 0
        %473 = vmatpush1.bf16.msra.mxu0 0
        %474 = vmatprep.subr.bf16.mxu0 0
        %475 = vmatpush1.bf16.msra.mxu0 0
        %476 = vmatprep.subr.bf16.mxu0 0
        %477 = vmatpush1.bf16.msra.mxu0 0
        %478 = vmatprep.subr.bf16.mxu0 0
        %479 = vmatpush1.bf16.msra.mxu0 0
        %480 = vmatprep.subr.bf16.mxu0 0
        %481 = vmatpush1.bf16.msra.mxu0 0
        %482 = vmatprep.subr.bf16.mxu0 0
        %483 = vmatpush1.bf16.msra.mxu0 0
        %484 = vmatprep.subr.bf16.mxu0 0
        %485 = vmatpush1.bf16.msra.mxu0 0
        %486 = vmatprep.subr.bf16.mxu0 0
        %487 = vmatpush1.bf16.msra.mxu0 0
        %488 = vmatprep.mubr.bf16.mxu0 0
        %489 = vmatmul.mubr.bf16.gmra.mrb[0].mxu0 %v454
        %v490 = vpop.f32.mrb[0].mxu0
        %v491 = vadd.f32 0.0, %v490
        %v492 = vpop.f32.mrb[0].mxu0
        %v493 = vpop.f32.mrb[0].mxu0
        %v494 = vpop.f32.mrb[0].mxu0
        %495 = vdwg.mxu0
        %s496 = scalar_lea.vmem %s345, 12
        %v497 = vld [vmem:[%s496] sm:$0xf]
        %v499 = vsel %vm358, %v497, 0
        %501 = vmatprep.subr.bf16.mxu0 0
        %502 = vmatpush1.bf16.msra.mxu0 %v364
        %503 = vmatprep.subr.bf16.mxu0 0
        %504 = vmatpush1.bf16.msra.mxu0 0
        %505 = vmatprep.subr.bf16.mxu0 0
        %506 = vmatpush1.bf16.msra.mxu0 0
        %507 = vmatprep.subr.bf16.mxu0 0
        %508 = vmatpush1.bf16.msra.mxu0 0
        %509 = vmatprep.subr.bf16.mxu0 0
        %510 = vmatpush1.bf16.msra.mxu0 0
        %511 = vmatprep.subr.bf16.mxu0 0
        %512 = vmatpush1.bf16.msra.mxu0 0
        %513 = vmatprep.subr.bf16.mxu0 0
        %514 = vmatpush1.bf16.msra.mxu0 0
        %515 = vmatprep.subr.bf16.mxu0 0
        %516 = vmatpush1.bf16.msra.mxu0 0
        %517 = vmatprep.subr.bf16.mxu0 0
        %518 = vmatpush1.bf16.msra.mxu0 0
        %519 = vmatprep.subr.bf16.mxu0 0
        %520 = vmatpush1.bf16.msra.mxu0 0
        %521 = vmatprep.subr.bf16.mxu0 0
        %522 = vmatpush1.bf16.msra.mxu0 0
        %523 = vmatprep.subr.bf16.mxu0 0
        %524 = vmatpush1.bf16.msra.mxu0 0
        %525 = vmatprep.subr.bf16.mxu0 0
        %526 = vmatpush1.bf16.msra.mxu0 0
        %527 = vmatprep.subr.bf16.mxu0 0
        %528 = vmatpush1.bf16.msra.mxu0 0
        %529 = vmatprep.subr.bf16.mxu0 0
        %530 = vmatpush1.bf16.msra.mxu0 0
        %531 = vmatprep.subr.bf16.mxu0 0
        %532 = vmatpush1.bf16.msra.mxu0 0
        %533 = vmatprep.mubr.bf16.mxu0 0
        %534 = vmatmul.mubr.bf16.gmra.mrb[0].mxu0 %v499
        %v535 = vpop.f32.mrb[0].mxu0
        %v536 = vadd.f32 0.0, %v535
        %v537 = vpop.f32.mrb[0].mxu0
        %v538 = vpop.f32.mrb[0].mxu0
        %v539 = vpop.f32.mrb[0].mxu0
        %540 = vdwg.mxu0
        %s541 = scalar_lea.vmem %s345, 16
        %v542 = vld [vmem:[%s541] sm:$0xf]
        %v544 = vsel %vm358, %v542, 0
        %546 = vmatprep.subr.bf16.mxu0 0
        %547 = vmatpush1.bf16.msra.mxu0 %v364
        %548 = vmatprep.subr.bf16.mxu0 0
        %549 = vmatpush1.bf16.msra.mxu0 0
        %550 = vmatprep.subr.bf16.mxu0 0
        %551 = vmatpush1.bf16.msra.mxu0 0
        %552 = vmatprep.subr.bf16.mxu0 0
        %553 = vmatpush1.bf16.msra.mxu0 0
        %554 = vmatprep.subr.bf16.mxu0 0
        %555 = vmatpush1.bf16.msra.mxu0 0
        %556 = vmatprep.subr.bf16.mxu0 0
        %557 = vmatpush1.bf16.msra.mxu0 0
        %558 = vmatprep.subr.bf16.mxu0 0
        %559 = vmatpush1.bf16.msra.mxu0 0
        %560 = vmatprep.subr.bf16.mxu0 0
        %561 = vmatpush1.bf16.msra.mxu0 0
        %562 = vmatprep.subr.bf16.mxu0 0
        %563 = vmatpush1.bf16.msra.mxu0 0
        %564 = vmatprep.subr.bf16.mxu0 0
        %565 = vmatpush1.bf16.msra.mxu0 0
        %566 = vmatprep.subr.bf16.mxu0 0
        %567 = vmatpush1.bf16.msra.mxu0 0
        %568 = vmatprep.subr.bf16.mxu0 0
        %569 = vmatpush1.bf16.msra.mxu0 0
        %570 = vmatprep.subr.bf16.mxu0 0
        %571 = vmatpush1.bf16.msra.mxu0 0
        %572 = vmatprep.subr.bf16.mxu0 0
        %573 = vmatpush1.bf16.msra.mxu0 0
        %574 = vmatprep.subr.bf16.mxu0 0
        %575 = vmatpush1.bf16.msra.mxu0 0
        %576 = vmatprep.subr.bf16.mxu0 0
        %577 = vmatpush1.bf16.msra.mxu0 0
        %578 = vmatprep.mubr.bf16.mxu0 0
        %579 = vmatmul.mubr.bf16.gmra.mrb[0].mxu0 %v544
        %v580 = vpop.f32.mrb[0].mxu0
        %v581 = vadd.f32 0.0, %v580
        %v582 = vpop.f32.mrb[0].mxu0
        %v583 = vpop.f32.mrb[0].mxu0
        %v584 = vpop.f32.mrb[0].mxu0
        %585 = vdwg.mxu0
        %s586 = scalar_lea.vmem %s345, 20
        %v587 = vld [vmem:[%s586] sm:$0xf]
        %v589 = vsel %vm358, %v587, 0
        %591 = vmatprep.subr.bf16.mxu0 0
        %592 = vmatpush1.bf16.msra.mxu0 %v364
        %593 = vmatprep.subr.bf16.mxu0 0
        %594 = vmatpush1.bf16.msra.mxu0 0
        %595 = vmatprep.subr.bf16.mxu0 0
        %596 = vmatpush1.bf16.msra.mxu0 0
        %597 = vmatprep.subr.bf16.mxu0 0
        %598 = vmatpush1.bf16.msra.mxu0 0
        %599 = vmatprep.subr.bf16.mxu0 0
        %600 = vmatpush1.bf16.msra.mxu0 0
        %601 = vmatprep.subr.bf16.mxu0 0
        %602 = vmatpush1.bf16.msra.mxu0 0
        %603 = vmatprep.subr.bf16.mxu0 0
        %604 = vmatpush1.bf16.msra.mxu0 0
        %605 = vmatprep.subr.bf16.mxu0 0
        %606 = vmatpush1.bf16.msra.mxu0 0
        %607 = vmatprep.subr.bf16.mxu0 0
        %608 = vmatpush1.bf16.msra.mxu0 0
        %609 = vmatprep.subr.bf16.mxu0 0
        %610 = vmatpush1.bf16.msra.mxu0 0
        %611 = vmatprep.subr.bf16.mxu0 0
        %612 = vmatpush1.bf16.msra.mxu0 0
        %613 = vmatprep.subr.bf16.mxu0 0
        %614 = vmatpush1.bf16.msra.mxu0 0
        %615 = vmatprep.subr.bf16.mxu0 0
        %616 = vmatpush1.bf16.msra.mxu0 0
        %617 = vmatprep.subr.bf16.mxu0 0
        %618 = vmatpush1.bf16.msra.mxu0 0
        %619 = vmatprep.subr.bf16.mxu0 0
        %620 = vmatpush1.bf16.msra.mxu0 0
        %621 = vmatprep.subr.bf16.mxu0 0
        %622 = vmatpush1.bf16.msra.mxu0 0
        %623 = vmatprep.mubr.bf16.mxu0 0
        %624 = vmatmul.mubr.bf16.gmra.mrb[0].mxu0 %v589
        %v625 = vpop.f32.mrb[0].mxu0
        %v626 = vadd.f32 0.0, %v625
        %v627 = vpop.f32.mrb[0].mxu0
        %v628 = vpop.f32.mrb[0].mxu0
        %v629 = vpop.f32.mrb[0].mxu0
        %630 = vdwg.mxu0
        %s631 = scalar_lea.vmem %s345, 24
        %v632 = vld [vmem:[%s631] sm:$0xf]
        %v634 = vsel %vm358, %v632, 0
        %636 = vmatprep.subr.bf16.mxu0 0
        %637 = vmatpush1.bf16.msra.mxu0 %v364
        %638 = vmatprep.subr.bf16.mxu0 0
        %639 = vmatpush1.bf16.msra.mxu0 0
        %640 = vmatprep.subr.bf16.mxu0 0
        %641 = vmatpush1.bf16.msra.mxu0 0
        %642 = vmatprep.subr.bf16.mxu0 0
        %643 = vmatpush1.bf16.msra.mxu0 0
        %644 = vmatprep.subr.bf16.mxu0 0
        %645 = vmatpush1.bf16.msra.mxu0 0
        %646 = vmatprep.subr.bf16.mxu0 0
        %647 = vmatpush1.bf16.msra.mxu0 0
        %648 = vmatprep.subr.bf16.mxu0 0
        %649 = vmatpush1.bf16.msra.mxu0 0
        %650 = vmatprep.subr.bf16.mxu0 0
        %651 = vmatpush1.bf16.msra.mxu0 0
        %652 = vmatprep.subr.bf16.mxu0 0
        %653 = vmatpush1.bf16.msra.mxu0 0
        %654 = vmatprep.subr.bf16.mxu0 0
        %655 = vmatpush1.bf16.msra.mxu0 0
        %656 = vmatprep.subr.bf16.mxu0 0
        %657 = vmatpush1.bf16.msra.mxu0 0
        %658 = vmatprep.subr.bf16.mxu0 0
        %659 = vmatpush1.bf16.msra.mxu0 0
        %660 = vmatprep.subr.bf16.mxu0 0
        %661 = vmatpush1.bf16.msra.mxu0 0
        %662 = vmatprep.subr.bf16.mxu0 0
        %663 = vmatpush1.bf16.msra.mxu0 0
        %664 = vmatprep.subr.bf16.mxu0 0
        %665 = vmatpush1.bf16.msra.mxu0 0
        %666 = vmatprep.subr.bf16.mxu0 0
        %667 = vmatpush1.bf16.msra.mxu0 0
        %668 = vmatprep.mubr.bf16.mxu0 0
        %669 = vmatmul.mubr.bf16.gmra.mrb[0].mxu0 %v634
        %v670 = vpop.f32.mrb[0].mxu0
        %v671 = vadd.f32 0.0, %v670
        %v672 = vpop.f32.mrb[0].mxu0
        %v673 = vpop.f32.mrb[0].mxu0
        %v674 = vpop.f32.mrb[0].mxu0
        %675 = vdwg.mxu0
        %s676 = scalar_lea.vmem %s345, 28
        %v677 = vld [vmem:[%s676] sm:$0xf]
        %v679 = vsel %vm358, %v677, 0
        %681 = vmatprep.subr.bf16.mxu0 0
        %682 = vmatpush1.bf16.msra.mxu0 %v364
        %683 = vmatprep.subr.bf16.mxu0 0
        %684 = vmatpush1.bf16.msra.mxu0 0
        %685 = vmatprep.subr.bf16.mxu0 0
        %686 = vmatpush1.bf16.msra.mxu0 0
        %687 = vmatprep.subr.bf16.mxu0 0
        %688 = vmatpush1.bf16.msra.mxu0 0
        %689 = vmatprep.subr.bf16.mxu0 0
        %690 = vmatpush1.bf16.msra.mxu0 0
        %691 = vmatprep.subr.bf16.mxu0 0
        %692 = vmatpush1.bf16.msra.mxu0 0
        %693 = vmatprep.subr.bf16.mxu0 0
        %694 = vmatpush1.bf16.msra.mxu0 0
        %695 = vmatprep.subr.bf16.mxu0 0
        %696 = vmatpush1.bf16.msra.mxu0 0
        %697 = vmatprep.subr.bf16.mxu0 0
        %698 = vmatpush1.bf16.msra.mxu0 0
        %699 = vmatprep.subr.bf16.mxu0 0
        %700 = vmatpush1.bf16.msra.mxu0 0
        %701 = vmatprep.subr.bf16.mxu0 0
        %702 = vmatpush1.bf16.msra.mxu0 0
        %703 = vmatprep.subr.bf16.mxu0 0
        %704 = vmatpush1.bf16.msra.mxu0 0
        %705 = vmatprep.subr.bf16.mxu0 0
        %706 = vmatpush1.bf16.msra.mxu0 0
        %707 = vmatprep.subr.bf16.mxu0 0
        %708 = vmatpush1.bf16.msra.mxu0 0
        %709 = vmatprep.subr.bf16.mxu0 0
        %710 = vmatpush1.bf16.msra.mxu0 0
        %711 = vmatprep.subr.bf16.mxu0 0
        %712 = vmatpush1.bf16.msra.mxu0 0
        %713 = vmatprep.mubr.bf16.mxu0 0
        %714 = vmatmul.mubr.bf16.gmra.mrb[0].mxu0 %v679
        %v715 = vpop.f32.mrb[0].mxu0
        %v716 = vadd.f32 0.0, %v715
        %v717 = vpop.f32.mrb[0].mxu0
        %v718 = vpop.f32.mrb[0].mxu0
        %v719 = vpop.f32.mrb[0].mxu0
        %720 = vdwg.mxu0
        %v721 = vmul.f32 %v446, 0.0
        %v722 = vadd.f32 %v401, %v721
        %v723 = vmul.f32 %v401, 0.53333336
        %v724 = vmul.f32 %v446, 0.46666667
        %v725 = vadd.f32 %v723, %v724
        %v726 = vmul.f32 %v401, 0.06666667
        %v727 = vmul.f32 %v446, 0.93333334
        %v728 = vadd.f32 %v726, %v727
        %v729 = vmul.f32 %v446, 0.6
        %v730 = vmul.f32 %v491, 0.4
        %v731 = vadd.f32 %v729, %v730
        %v732 = vmul.f32 %v446, 0.13333334
        %v733 = vmul.f32 %v491, 0.8666667
        %v734 = vadd.f32 %v732, %v733
        %v735 = vmul.f32 %v491, 0.6666667
        %v736 = vmul.f32 %v536, 0.33333334
        %v737 = vadd.f32 %v735, %v736
        %v738 = vmul.f32 %v491, 0.2
        %v739 = vmul.f32 %v536, 0.8
        %v740 = vadd.f32 %v738, %v739
        %v741 = vmul.f32 %v536, 0.73333335
        %v742 = vmul.f32 %v581, 0.26666668
        %v743 = vadd.f32 %v741, %v742
        %v744 = vmul.f32 %v536, 0.26666668
        %v745 = vmul.f32 %v581, 0.73333335
        %v746 = vadd.f32 %v744, %v745
        %v747 = vmul.f32 %v581, 0.8
        %v748 = vmul.f32 %v626, 0.2
        %v749 = vadd.f32 %v747, %v748
        %v750 = vmul.f32 %v581, 0.33333334
        %v751 = vmul.f32 %v626, 0.6666667
        %v752 = vadd.f32 %v750, %v751
        %v753 = vmul.f32 %v626, 0.8666667
        %v754 = vmul.f32 %v671, 0.13333334
        %v755 = vadd.f32 %v753, %v754
        %v756 = vmul.f32 %v626, 0.4
        %v757 = vmul.f32 %v671, 0.6
        %v758 = vadd.f32 %v756, %v757
        %v759 = vmul.f32 %v671, 0.93333334
        %v760 = vmul.f32 %v716, 0.06666667
        %v761 = vadd.f32 %v759, %v760
        %v762 = vmul.f32 %v671, 0.46666667
        %v763 = vmul.f32 %v716, 0.53333336
        %v764 = vadd.f32 %v762, %v763
        %v765 = vmul.f32 %v716, 0.0
        %v766 = vadd.f32 %v716, %v765
        %768 = vrot.lane.b32.xlu0 %v725, 16
        %v769 = vpop.permute.xlu0 %768
        %772 = vrot.lane.b32.xlu0 %v728, 32
        %v773 = vpop.permute.xlu0 %772
        %776 = vrot.lane.b32.xlu0 %v731, 48
        %v777 = vpop.permute.xlu0 %776
        %780 = vrot.lane.b32.xlu0 %v734, 64
        %v781 = vpop.permute.xlu0 %780
        %784 = vrot.lane.b32.xlu0 %v737, 80
        %v785 = vpop.permute.xlu0 %784
        %788 = vrot.lane.b32.xlu0 %v740, 96
        %v789 = vpop.permute.xlu0 %788
        %792 = vrot.lane.b32.xlu0 %v743, 112
        %v793 = vpop.permute.xlu0 %792
        %796 = vrot.lane.b32.xlu0 %v749, 16
        %v797 = vpop.permute.xlu0 %796
        %800 = vrot.lane.b32.xlu0 %v752, 32
        %v801 = vpop.permute.xlu0 %800
        %804 = vrot.lane.b32.xlu0 %v755, 48
        %v805 = vpop.permute.xlu0 %804
        %808 = vrot.lane.b32.xlu0 %v758, 64
        %v809 = vpop.permute.xlu0 %808
        %812 = vrot.lane.b32.xlu0 %v761, 80
        %v813 = vpop.permute.xlu0 %812
        %816 = vrot.lane.b32.xlu0 %v764, 96
        %v817 = vpop.permute.xlu0 %816
        %820 = vrot.lane.b32.xlu0 %v766, 112
        %v821 = vpop.permute.xlu0 %820
        %vm823 = vcmask 130048
        %v824 = vsel %vm823, %v722, %v769
        %vm825 = vcmask 261120
        %v826 = vsel %vm825, %v824, %v773
        %vm827 = vcmask 392192
        %v828 = vsel %vm827, %v826, %v777
        %vm829 = vcmask 523264
        %v830 = vsel %vm829, %v828, %v781
        %vm831 = vcmask 654336
        %v832 = vsel %vm831, %v830, %v785
        %vm833 = vcmask 785408
        %v834 = vsel %vm833, %v832, %v789
        %vm835 = vcmask 916480
        %v836 = vsel %vm835, %v834, %v793
        %v837 = vsel %vm823, %v746, %v797
        %v838 = vsel %vm825, %v837, %v801
        %v839 = vsel %vm827, %v838, %v805
        %v840 = vsel %vm829, %v839, %v809
        %v841 = vsel %vm831, %v840, %v813
        %v842 = vsel %vm833, %v841, %v817
        %v843 = vsel %vm835, %v842, %v821
        %v844 = vpack.c.bf16 %v836, %v836
        %v845 = vpack.c.bf16 %v843, %v843
        %v846 = vld [vmem:[%s350] sm:$0xf]
        %v847 = vld [vmem:[%s4] sm:$0xf]
        %v848 = vld [vmem:[%s4 + $0x4] sm:$0xf]
        %v849 = vld [vmem:[%s4 + $0x8] sm:$0xf]
        %v850 = vld [vmem:[%s4 + $0xc] sm:$0xf]
        %v851 = vld [vmem:[%s4 + $0x10] sm:$0xf]
        %v852 = vld [vmem:[%s4 + $0x14] sm:$0xf]
        %v853 = vld [vmem:[%s4 + $0x18] sm:$0xf]
        %v854 = vld [vmem:[%s4 + $0x1c] sm:$0xf]
        %v855 = vld [vmem:[%s4 + $0x20] sm:$0xf]
        %v856 = vld [vmem:[%s5] sm:$0xf]
        %v857 = vld [vmem:[%s5 + $0x4] sm:$0xf]
        %v858 = vld [vmem:[%s5 + $0x8] sm:$0xf]
        %v859 = vld [vmem:[%s5 + $0xc] sm:$0xf]
        %v860 = vld [vmem:[%s5 + $0x10] sm:$0xf]
        %v861 = vld [vmem:[%s5 + $0x14] sm:$0xf]
        %v862 = vld [vmem:[%s5 + $0x18] sm:$0xf]
        %v863 = vld [vmem:[%s5 + $0x1c] sm:$0xf]
        %v864 = vld [vmem:[%s5 + $0x20] sm:$0xf]
        %v874 = vunpack.c.l.b16 %v856
        %v875 = vunpack.c.l.b16 %v857
        %v876 = vunpack.c.l.b16 %v858
        %v877 = vunpack.c.l.b16 %v859
        %v878 = vunpack.c.l.b16 %v860
        %v879 = vunpack.c.l.b16 %v861
        %v880 = vunpack.c.l.b16 %v862
        %v881 = vunpack.c.l.b16 %v863
        %v882 = vunpack.c.l.b16 %v864
        %v883 = vpack.c.b16 %v875, %v874
        %v884 = vpack.c.b16 %v877, %v876
        %v885 = vpack.c.b16 %v879, %v878
        %v886 = vpack.c.b16 %v881, %v880
        %v887 = vpack.c.b16 %v882, %v882
        %v889 = vsel %vm358, %v883, 0
        %v892 = vsel %vm358, %v884, 0
        %v895 = vsel %vm358, %v885, 0
        %v898 = vsel %vm358, %v886, 0
        %v901 = vsel %vm358, %v887, 0
        %v904 = vsel %vm362, %v844, 0
        %v907 = vsel %vm362, %v845, 0
        %909 = vmatprep.subr.bf16.mxu0 %v907
        %910 = vmatpush1.bf16.msra.mxu0 %v904
        %911 = vmatprep.subr.bf16.mxu0 0
        %912 = vmatpush1.bf16.msra.mxu0 0
        %913 = vmatprep.subr.bf16.mxu0 0
        %914 = vmatpush1.bf16.msra.mxu0 0
        %915 = vmatprep.subr.bf16.mxu0 0
        %916 = vmatpush1.bf16.msra.mxu0 0
        %917 = vmatprep.subr.bf16.mxu0 0
        %918 = vmatpush1.bf16.msra.mxu0 0
        %919 = vmatprep.subr.bf16.mxu0 0
        %920 = vmatpush1.bf16.msra.mxu0 0
        %921 = vmatprep.subr.bf16.mxu0 0
        %922 = vmatpush1.bf16.msra.mxu0 0
        %923 = vmatprep.subr.bf16.mxu0 0
        %924 = vmatpush1.bf16.msra.mxu0 0
        %925 = vmatprep.subr.bf16.mxu0 0
        %926 = vmatpush1.bf16.msra.mxu0 0
        %927 = vmatprep.subr.bf16.mxu0 0
        %928 = vmatpush1.bf16.msra.mxu0 0
        %929 = vmatprep.subr.bf16.mxu0 0
        %930 = vmatpush1.bf16.msra.mxu0 0
        %931 = vmatprep.subr.bf16.mxu0 0
        %932 = vmatpush1.bf16.msra.mxu0 0
        %933 = vmatprep.subr.bf16.mxu0 0
        %934 = vmatpush1.bf16.msra.mxu0 0
        %935 = vmatprep.subr.bf16.mxu0 0
        %936 = vmatpush1.bf16.msra.mxu0 0
        %937 = vmatprep.subr.bf16.mxu0 0
        %938 = vmatpush1.bf16.msra.mxu0 0
        %939 = vmatprep.subr.bf16.mxu0 0
        %940 = vmatpush1.bf16.msra.mxu0 0
        %941 = vmatprep.mubr.bf16.mxu0 0
        %942 = vmatmul.mubr.bf16.gmra.mrb[0].mxu0 %v889
        %v943 = vpop.f32.mrb[0].mxu0
        %v944 = vadd.f32 0.0, %v943
        %v945 = vpop.f32.mrb[0].mxu0
        %v946 = vadd.f32 0.0, %v945
        %v947 = vpop.f32.mrb[0].mxu0
        %v948 = vadd.f32 0.0, %v947
        %v949 = vpop.f32.mrb[0].mxu0
        %v950 = vadd.f32 0.0, %v949
        %951 = vmatprep.mubr.bf16.mxu0 0
        %952 = vmatmul.mubr.bf16.gmra.mrb[0].mxu0 %v892
        %v953 = vpop.f32.mrb[0].mxu0
        %v954 = vadd.f32 0.0, %v953
        %v955 = vpop.f32.mrb[0].mxu0
        %v956 = vadd.f32 0.0, %v955
        %v957 = vpop.f32.mrb[0].mxu0
        %v958 = vadd.f32 0.0, %v957
        %v959 = vpop.f32.mrb[0].mxu0
        %v960 = vadd.f32 0.0, %v959
        %961 = vmatprep.mubr.bf16.mxu0 0
        %962 = vmatmul.mubr.bf16.gmra.mrb[0].mxu0 %v895
        %v963 = vpop.f32.mrb[0].mxu0
        %v964 = vadd.f32 0.0, %v963
        %v965 = vpop.f32.mrb[0].mxu0
        %v966 = vadd.f32 0.0, %v965
        %v967 = vpop.f32.mrb[0].mxu0
        %v968 = vadd.f32 0.0, %v967
        %v969 = vpop.f32.mrb[0].mxu0
        %v970 = vadd.f32 0.0, %v969
        %971 = vmatprep.mubr.bf16.mxu0 0
        %972 = vmatmul.mubr.bf16.gmra.mrb[0].mxu0 %v898
        %v973 = vpop.f32.mrb[0].mxu0
        %v974 = vadd.f32 0.0, %v973
        %v975 = vpop.f32.mrb[0].mxu0
        %v976 = vadd.f32 0.0, %v975
        %v977 = vpop.f32.mrb[0].mxu0
        %v978 = vadd.f32 0.0, %v977
        %v979 = vpop.f32.mrb[0].mxu0
        %v980 = vadd.f32 0.0, %v979
        %981 = vmatprep.mubr.bf16.mxu0 0
        %982 = vmatmul.mubr.bf16.gmra.mrb[0].mxu0 %v901
        %v983 = vpop.f32.mrb[0].mxu0
        %v984 = vadd.f32 0.0, %v983
        %v985 = vpop.f32.mrb[0].mxu0
        %v986 = vadd.f32 0.0, %v985
        %v987 = vpop.f32.mrb[0].mxu0
        %v988 = vpop.f32.mrb[0].mxu0
        %989 = vdwg.mxu0
        %v999 = vunpack.c.l.b16 %v847
        %v1000 = vunpack.c.l.b16 %v848
        %v1001 = vunpack.c.l.b16 %v849
        %v1002 = vunpack.c.l.b16 %v850
        %v1003 = vunpack.c.l.b16 %v851
        %v1004 = vunpack.c.l.b16 %v852
        %v1005 = vunpack.c.l.b16 %v853
        %v1006 = vunpack.c.l.b16 %v854
        %v1007 = vunpack.c.l.b16 %v855
        %v1008 = vpack.c.b16 %v1000, %v999
        %v1009 = vpack.c.b16 %v1002, %v1001
        %v1010 = vpack.c.b16 %v1004, %v1003
        %v1011 = vpack.c.b16 %v1006, %v1005
        %v1012 = vpack.c.b16 %v1007, %v1007
        %v1015 = vunpack.c.l.s4 1983009808
        %v1016 = vunpack.c.0.s8 %v1015
        %v1017 = vlaneseq
        %v1018 = vshrl.u32 %v1017, 7
        %v1019 = vsub.s32 %v1016, %v1018
        %v1020 = vrot.slane %v846, %v1019
        %v1021 = vcombine.high %v1020, %v1020
        %vm1022 = vcmask 31744
        %v1024 = vsel %vm1022, %v1008, 0
        %v1027 = vsel %vm1022, %v1009, 0
        %v1030 = vsel %vm1022, %v1010, 0
        %v1033 = vsel %vm1022, %v1011, 0
        %v1036 = vsel %vm1022, %v1012, 0
        %vm1038 = vcmask 1041408
        %v1040 = vsel %vm1038, %v1020, 0
        %v1043 = vsel %vm1038, %v1021, 0
        %1045 = vmatprep.subr.bf16.mxu0 %v1043
        %1046 = vmatpush1.bf16.msra.mxu0 %v1040
        %1047 = vmatprep.subr.bf16.mxu0 0
        %1048 = vmatpush1.bf16.msra.mxu0 0
        %1049 = vmatprep.subr.bf16.mxu0 0
        %1050 = vmatpush1.bf16.msra.mxu0 0
        %1051 = vmatprep.subr.bf16.mxu0 0
        %1052 = vmatpush1.bf16.msra.mxu0 0
        %1053 = vmatprep.subr.bf16.mxu0 0
        %1054 = vmatpush1.bf16.msra.mxu0 0
        %1055 = vmatprep.subr.bf16.mxu0 0
        %1056 = vmatpush1.bf16.msra.mxu0 0
        %1057 = vmatprep.subr.bf16.mxu0 0
        %1058 = vmatpush1.bf16.msra.mxu0 0
        %1059 = vmatprep.subr.bf16.mxu0 0
        %1060 = vmatpush1.bf16.msra.mxu0 0
        %1061 = vmatprep.subr.bf16.mxu0 0
        %1062 = vmatpush1.bf16.msra.mxu0 0
        %1063 = vmatprep.subr.bf16.mxu0 0
        %1064 = vmatpush1.bf16.msra.mxu0 0
        %1065 = vmatprep.subr.bf16.mxu0 0
        %1066 = vmatpush1.bf16.msra.mxu0 0
        %1067 = vmatprep.subr.bf16.mxu0 0
        %1068 = vmatpush1.bf16.msra.mxu0 0
        %1069 = vmatprep.subr.bf16.mxu0 0
        %1070 = vmatpush1.bf16.msra.mxu0 0
        %1071 = vmatprep.subr.bf16.mxu0 0
        %1072 = vmatpush1.bf16.msra.mxu0 0
        %1073 = vmatprep.subr.bf16.mxu0 0
        %1074 = vmatpush1.bf16.msra.mxu0 0
        %1075 = vmatprep.subr.bf16.mxu0 0
        %1076 = vmatpush1.bf16.msra.mxu0 0
        %1077 = vmatprep.mubr.bf16.mxu0 0
        %1078 = vmatmul.mubr.bf16.gmra.mrb[0].mxu0 %v1024
        %v1079 = vpop.f32.mrb[0].mxu0
        %v1080 = vadd.f32 %v944, %v1079
        %v1081 = vpop.f32.mrb[0].mxu0
        %v1082 = vadd.f32 %v946, %v1081
        %v1083 = vpop.f32.mrb[0].mxu0
        %v1084 = vadd.f32 %v948, %v1083
        %v1085 = vpop.f32.mrb[0].mxu0
        %v1086 = vadd.f32 %v950, %v1085
        %1087 = vmatprep.mubr.bf16.mxu0 0
        %1088 = vmatmul.mubr.bf16.gmra.mrb[0].mxu0 %v1027
        %v1089 = vpop.f32.mrb[0].mxu0
        %v1090 = vadd.f32 %v954, %v1089
        %v1091 = vpop.f32.mrb[0].mxu0
        %v1092 = vadd.f32 %v956, %v1091
        %v1093 = vpop.f32.mrb[0].mxu0
        %v1094 = vadd.f32 %v958, %v1093
        %v1095 = vpop.f32.mrb[0].mxu0
        %v1096 = vadd.f32 %v960, %v1095
        %1097 = vmatprep.mubr.bf16.mxu0 0
        %1098 = vmatmul.mubr.bf16.gmra.mrb[0].mxu0 %v1030
        %v1099 = vpop.f32.mrb[0].mxu0
        %v1100 = vadd.f32 %v964, %v1099
        %v1101 = vpop.f32.mrb[0].mxu0
        %v1102 = vadd.f32 %v966, %v1101
        %v1103 = vpop.f32.mrb[0].mxu0
        %v1104 = vadd.f32 %v968, %v1103
        %v1105 = vpop.f32.mrb[0].mxu0
        %v1106 = vadd.f32 %v970, %v1105
        %1107 = vmatprep.mubr.bf16.mxu0 0
        %1108 = vmatmul.mubr.bf16.gmra.mrb[0].mxu0 %v1033
        %v1109 = vpop.f32.mrb[0].mxu0
        %v1110 = vadd.f32 %v974, %v1109
        %v1111 = vpop.f32.mrb[0].mxu0
        %v1112 = vadd.f32 %v976, %v1111
        %v1113 = vpop.f32.mrb[0].mxu0
        %v1114 = vadd.f32 %v978, %v1113
        %v1115 = vpop.f32.mrb[0].mxu0
        %v1116 = vadd.f32 %v980, %v1115
        %1117 = vmatprep.mubr.bf16.mxu0 0
        %1118 = vmatmul.mubr.bf16.gmra.mrb[0].mxu0 %v1036
        %v1119 = vpop.f32.mrb[0].mxu0
        %v1120 = vadd.f32 %v984, %v1119
        %v1121 = vpop.f32.mrb[0].mxu0
        %v1122 = vadd.f32 %v986, %v1121
        %v1123 = vpop.f32.mrb[0].mxu0
        %v1124 = vpop.f32.mrb[0].mxu0
        %1125 = vdwg.mxu0
        %v1126 = vld [vmem:[%s6] sm:$0xff]
        %1145 = vrot.lane.b32.xlu0 %v1080, 17
        %v1146 = vpop.permute.xlu0 %1145
        %1147 = vrot.lane.b32.xlu0 %v1082, 17
        %v1148 = vpop.permute.xlu0 %1147
        %1149 = vrot.lane.b32.xlu0 %v1084, 17
        %v1150 = vpop.permute.xlu0 %1149
        %1151 = vrot.lane.b32.xlu0 %v1086, 17
        %v1152 = vpop.permute.xlu0 %1151
        %1153 = vrot.lane.b32.xlu0 %v1090, 17
        %v1154 = vpop.permute.xlu0 %1153
        %1155 = vrot.lane.b32.xlu0 %v1092, 17
        %v1156 = vpop.permute.xlu0 %1155
        %1157 = vrot.lane.b32.xlu0 %v1094, 17
        %v1158 = vpop.permute.xlu0 %1157
        %1159 = vrot.lane.b32.xlu0 %v1096, 17
        %v1160 = vpop.permute.xlu0 %1159
        %1161 = vrot.lane.b32.xlu0 %v1100, 17
        %v1162 = vpop.permute.xlu0 %1161
        %1163 = vrot.lane.b32.xlu0 %v1102, 17
        %v1164 = vpop.permute.xlu0 %1163
        %1165 = vrot.lane.b32.xlu0 %v1104, 17
        %v1166 = vpop.permute.xlu0 %1165
        %1167 = vrot.lane.b32.xlu0 %v1106, 17
        %v1168 = vpop.permute.xlu0 %1167
        %1169 = vrot.lane.b32.xlu0 %v1110, 17
        %v1170 = vpop.permute.xlu0 %1169
        %1171 = vrot.lane.b32.xlu0 %v1112, 17
        %v1172 = vpop.permute.xlu0 %1171
        %1173 = vrot.lane.b32.xlu0 %v1114, 17
        %v1174 = vpop.permute.xlu0 %1173
        %1175 = vrot.lane.b32.xlu0 %v1116, 17
        %v1176 = vpop.permute.xlu0 %1175
        %1177 = vrot.lane.b32.xlu0 %v1120, 17
        %v1178 = vpop.permute.xlu0 %1177
        %1179 = vrot.lane.b32.xlu0 %v1122, 17
        %v1180 = vpop.permute.xlu0 %1179
        %vm1181 = vcmask 138240
        %v1182 = vsel %vm1181, %v1146, %v1148
        %v1183 = vsel %vm1181, %v1150, %v1152
        %v1184 = vsel %vm1181, %v1154, %v1156
        %v1185 = vsel %vm1181, %v1158, %v1160
        %v1186 = vsel %vm1181, %v1162, %v1164
        %v1187 = vsel %vm1181, %v1166, %v1168
        %v1188 = vsel %vm1181, %v1170, %v1172
        %v1189 = vsel %vm1181, %v1174, %v1176
        %v1190 = vsel %vm1181, %v1178, %v1180
        %v1217 = vsel %vm1181, 0.0, %v1146
        %v1218 = vsel %vm1181, 0.0, %v1150
        %v1219 = vsel %vm1181, 0.0, %v1154
        %v1220 = vsel %vm1181, 0.0, %v1158
        %v1221 = vsel %vm1181, 0.0, %v1162
        %v1222 = vsel %vm1181, 0.0, %v1166
        %v1223 = vsel %vm1181, 0.0, %v1170
        %v1224 = vsel %vm1181, 0.0, %v1174
        %v1225 = vsel %vm1181, 0.0, %v1178
        %v1226 = vsel %vm1181, %v1152, 0.0
        %v1227 = vsel %vm1181, %v1156, 0.0
        %v1228 = vsel %vm1181, %v1160, 0.0
        %v1229 = vsel %vm1181, %v1164, 0.0
        %v1230 = vsel %vm1181, %v1168, 0.0
        %v1231 = vsel %vm1181, %v1172, 0.0
        %v1232 = vsel %vm1181, %v1176, 0.0
        %v1233 = vsel %vm1181, %v1180, 0.0
        %v1234 = vlaneseq
        %v1235 = vshrl.u32 %v1234, 7
        %v1236 = vsub.s32 0, %v1235
        %v1237 = vrot.slane %v352, %v1236
        %v1238 = vlaneseq
        %v1239 = vshrl.u32 %v1238, 7
        %v1240 = vsub.s32 0, %v1239
        %v1241 = vrot.slane %v353, %v1240
        %v1242 = vmul.f32 %v1217, %v1237
        %v1243 = vmul.f32 %v1182, %v1241
        %v1244 = vadd.f32 %v1242, 0.0
        %v1245 = vadd.f32 %v1243, 0.0
        %v1246 = vlaneseq
        %v1247 = vshrl.u32 %v1246, 7
        %v1248 = vsub.s32 1, %v1247
        %v1249 = vrot.slane %v352, %v1248
        %v1250 = vlaneseq
        %v1251 = vshrl.u32 %v1250, 7
        %v1252 = vsub.s32 1, %v1251
        %v1253 = vrot.slane %v353, %v1252
        %1256 = vrot.lane.b32.xlu0 %v1249, 1
        %v1257 = vpop.permute.xlu0 %1256
        %1258 = vrot.lane.b32.xlu0 %v1253, 1
        %v1259 = vpop.permute.xlu0 %1258
        %vm1260 = vcmask 7168
        %v1261 = vsel %vm1260, %v1257, %v1259
        %v1265 = vmul.f32 %v1218, %v1257
        %v1266 = vmul.f32 %v1183, %v1261
        %v1267 = vmul.f32 %v1226, %v1259
        %1271 = vrot.lane.b32.xlu0 %v1265, 127
        %v1272 = vpop.permute.xlu0 %1271
        %1273 = vrot.lane.b32.xlu0 %v1266, 127
        %v1274 = vpop.permute.xlu0 %1273
        %1275 = vrot.lane.b32.xlu0 %v1267, 127
        %v1276 = vpop.permute.xlu0 %1275
        %vm1277 = vcmask 1039360
        %v1278 = vsel %vm1277, %v1272, %v1274
        %v1279 = vsel %vm1277, %v1274, %v1276
        %v1282 = vadd.f32 %v1244, %v1278
        %v1283 = vadd.f32 %v1245, %v1279
        %v1284 = vlaneseq
        %v1285 = vshrl.u32 %v1284, 7
        %v1286 = vsub.s32 2, %v1285
        %v1287 = vrot.slane %v352, %v1286
        %v1288 = vlaneseq
        %v1289 = vshrl.u32 %v1288, 7
        %v1290 = vsub.s32 2, %v1289
        %v1291 = vrot.slane %v353, %v1290
        %1294 = vrot.lane.b32.xlu0 %v1287, 2
        %v1295 = vpop.permute.xlu0 %1294
        %1296 = vrot.lane.b32.xlu0 %v1291, 2
        %v1297 = vpop.permute.xlu0 %1296
        %vm1298 = vcmask 15360
        %v1299 = vsel %vm1298, %v1295, %v1297
        %v1303 = vmul.f32 %v1219, %v1295
        %v1304 = vmul.f32 %v1184, %v1299
        %v1305 = vmul.f32 %v1227, %v1297
        %1309 = vrot.lane.b32.xlu0 %v1303, 126
        %v1310 = vpop.permute.xlu0 %1309
        %1311 = vrot.lane.b32.xlu0 %v1304, 126
        %v1312 = vpop.permute.xlu0 %1311
        %1313 = vrot.lane.b32.xlu0 %v1305, 126
        %v1314 = vpop.permute.xlu0 %1313
        %vm1315 = vcmask 1031168
        %v1316 = vsel %vm1315, %v1310, %v1312
        %v1317 = vsel %vm1315, %v1312, %v1314
        %v1320 = vadd.f32 %v1282, %v1316
        %v1321 = vadd.f32 %v1283, %v1317
        %v1322 = vlaneseq
        %v1323 = vshrl.u32 %v1322, 7
        %v1324 = vsub.s32 3, %v1323
        %v1325 = vrot.slane %v352, %v1324
        %v1326 = vlaneseq
        %v1327 = vshrl.u32 %v1326, 7
        %v1328 = vsub.s32 3, %v1327
        %v1329 = vrot.slane %v353, %v1328
        %1332 = vrot.lane.b32.xlu0 %v1325, 16
        %v1333 = vpop.permute.xlu0 %1332
        %1334 = vrot.lane.b32.xlu0 %v1329, 16
        %v1335 = vpop.permute.xlu0 %1334
        %v1336 = vsel %vm823, %v1333, %v1335
        %v1340 = vmul.f32 %v1220, %v1333
        %v1341 = vmul.f32 %v1185, %v1336
        %v1342 = vmul.f32 %v1228, %v1335
        %1346 = vrot.lane.b32.xlu0 %v1340, 112
        %v1347 = vpop.permute.xlu0 %1346
        %1348 = vrot.lane.b32.xlu0 %v1341, 112
        %v1349 = vpop.permute.xlu0 %1348
        %1350 = vrot.lane.b32.xlu0 %v1342, 112
        %v1351 = vpop.permute.xlu0 %1350
        %v1352 = vsel %vm835, %v1347, %v1349
        %v1353 = vsel %vm835, %v1349, %v1351
        %v1356 = vadd.f32 %v1320, %v1352
        %v1357 = vadd.f32 %v1321, %v1353
        %v1358 = vlaneseq
        %v1359 = vshrl.u32 %v1358, 7
        %v1360 = vsub.s32 4, %v1359
        %v1361 = vrot.slane %v352, %v1360
        %v1362 = vlaneseq
        %v1363 = vshrl.u32 %v1362, 7
        %v1364 = vsub.s32 4, %v1363
        %v1365 = vrot.slane %v353, %v1364
        %1368 = vrot.lane.b32.xlu0 %v1361, 17
        %v1369 = vpop.permute.xlu0 %1368
        %1370 = vrot.lane.b32.xlu0 %v1365, 17
        %v1371 = vpop.permute.xlu0 %1370
        %v1372 = vsel %vm1181, %v1369, %v1371
        %v1376 = vmul.f32 %v1221, %v1369
        %v1377 = vmul.f32 %v1186, %v1372
        %v1378 = vmul.f32 %v1229, %v1371
        %1382 = vrot.lane.b32.xlu0 %v1376, 111
        %v1383 = vpop.permute.xlu0 %1382
        %1384 = vrot.lane.b32.xlu0 %v1377, 111
        %v1385 = vpop.permute.xlu0 %1384
        %1386 = vrot.lane.b32.xlu0 %v1378, 111
        %v1387 = vpop.permute.xlu0 %1386
        %vm1388 = vcmask 908288
        %v1389 = vsel %vm1388, %v1383, %v1385
        %v1390 = vsel %vm1388, %v1385, %v1387
        %v1393 = vadd.f32 %v1356, %v1389
        %v1394 = vadd.f32 %v1357, %v1390
        %v1395 = vlaneseq
        %v1396 = vshrl.u32 %v1395, 7
        %v1397 = vsub.s32 5, %v1396
        %v1398 = vrot.slane %v352, %v1397
        %v1399 = vlaneseq
        %v1400 = vshrl.u32 %v1399, 7
        %v1401 = vsub.s32 5, %v1400
        %v1402 = vrot.slane %v353, %v1401
        %1405 = vrot.lane.b32.xlu0 %v1398, 18
        %v1406 = vpop.permute.xlu0 %1405
        %1407 = vrot.lane.b32.xlu0 %v1402, 18
        %v1408 = vpop.permute.xlu0 %1407
        %vm1409 = vcmask 146432
        %v1410 = vsel %vm1409, %v1406, %v1408
        %v1414 = vmul.f32 %v1222, %v1406
        %v1415 = vmul.f32 %v1187, %v1410
        %v1416 = vmul.f32 %v1230, %v1408
        %1420 = vrot.lane.b32.xlu0 %v1414, 110
        %v1421 = vpop.permute.xlu0 %1420
        %1422 = vrot.lane.b32.xlu0 %v1415, 110
        %v1423 = vpop.permute.xlu0 %1422
        %1424 = vrot.lane.b32.xlu0 %v1416, 110
        %v1425 = vpop.permute.xlu0 %1424
        %vm1426 = vcmask 900096
        %v1427 = vsel %vm1426, %v1421, %v1423
        %v1428 = vsel %vm1426, %v1423, %v1425
        %v1431 = vadd.f32 %v1393, %v1427
        %v1432 = vadd.f32 %v1394, %v1428
        %v1433 = vlaneseq
        %v1434 = vshrl.u32 %v1433, 7
        %v1435 = vsub.s32 6, %v1434
        %v1436 = vrot.slane %v352, %v1435
        %v1437 = vlaneseq
        %v1438 = vshrl.u32 %v1437, 7
        %v1439 = vsub.s32 6, %v1438
        %v1440 = vrot.slane %v353, %v1439
        %1443 = vrot.lane.b32.xlu0 %v1436, 32
        %v1444 = vpop.permute.xlu0 %1443
        %1445 = vrot.lane.b32.xlu0 %v1440, 32
        %v1446 = vpop.permute.xlu0 %1445
        %v1447 = vsel %vm825, %v1444, %v1446
        %v1451 = vmul.f32 %v1223, %v1444
        %v1452 = vmul.f32 %v1188, %v1447
        %v1453 = vmul.f32 %v1231, %v1446
        %1457 = vrot.lane.b32.xlu0 %v1451, 96
        %v1458 = vpop.permute.xlu0 %1457
        %1459 = vrot.lane.b32.xlu0 %v1452, 96
        %v1460 = vpop.permute.xlu0 %1459
        %1461 = vrot.lane.b32.xlu0 %v1453, 96
        %v1462 = vpop.permute.xlu0 %1461
        %v1463 = vsel %vm833, %v1458, %v1460
        %v1464 = vsel %vm833, %v1460, %v1462
        %v1467 = vadd.f32 %v1431, %v1463
        %v1468 = vadd.f32 %v1432, %v1464
        %v1469 = vlaneseq
        %v1470 = vshrl.u32 %v1469, 7
        %v1471 = vsub.s32 7, %v1470
        %v1472 = vrot.slane %v352, %v1471
        %v1473 = vlaneseq
        %v1474 = vshrl.u32 %v1473, 7
        %v1475 = vsub.s32 7, %v1474
        %v1476 = vrot.slane %v353, %v1475
        %1479 = vrot.lane.b32.xlu0 %v1472, 33
        %v1480 = vpop.permute.xlu0 %1479
        %1481 = vrot.lane.b32.xlu0 %v1476, 33
        %v1482 = vpop.permute.xlu0 %1481
        %vm1483 = vcmask 269312
        %v1484 = vsel %vm1483, %v1480, %v1482
        %v1488 = vmul.f32 %v1224, %v1480
        %v1489 = vmul.f32 %v1189, %v1484
        %v1490 = vmul.f32 %v1232, %v1482
        %1494 = vrot.lane.b32.xlu0 %v1488, 95
        %v1495 = vpop.permute.xlu0 %1494
        %1496 = vrot.lane.b32.xlu0 %v1489, 95
        %v1497 = vpop.permute.xlu0 %1496
        %1498 = vrot.lane.b32.xlu0 %v1490, 95
        %v1499 = vpop.permute.xlu0 %1498
        %vm1500 = vcmask 777216
        %v1501 = vsel %vm1500, %v1495, %v1497
        %v1502 = vsel %vm1500, %v1497, %v1499
        %v1505 = vadd.f32 %v1467, %v1501
        %v1506 = vadd.f32 %v1468, %v1502
        %v1507 = vlaneseq
        %v1508 = vshrl.u32 %v1507, 7
        %v1509 = vsub.s32 0, %v1508
        %v1510 = vrot.slane %v354, %v1509
        %v1511 = vlaneseq
        %v1512 = vshrl.u32 %v1511, 7
        %v1513 = vsub.s32 0, %v1512
        %v1514 = vrot.slane %v355, %v1513
        %1517 = vrot.lane.b32.xlu0 %v1510, 34
        %v1518 = vpop.permute.xlu0 %1517
        %1519 = vrot.lane.b32.xlu0 %v1514, 34
        %v1520 = vpop.permute.xlu0 %1519
        %vm1521 = vcmask 277504
        %v1522 = vsel %vm1521, %v1518, %v1520
        %v1526 = vmul.f32 %v1225, %v1518
        %v1527 = vmul.f32 %v1190, %v1522
        %v1528 = vmul.f32 %v1233, %v1520
        %1532 = vrot.lane.b32.xlu0 %v1526, 94
        %v1533 = vpop.permute.xlu0 %1532
        %1534 = vrot.lane.b32.xlu0 %v1527, 94
        %v1535 = vpop.permute.xlu0 %1534
        %1536 = vrot.lane.b32.xlu0 %v1528, 94
        %v1537 = vpop.permute.xlu0 %1536
        %vm1538 = vcmask 769024
        %v1539 = vsel %vm1538, %v1533, %v1535
        %v1540 = vsel %vm1538, %v1535, %v1537
        %v1543 = vadd.f32 %v1505, %v1539
        %v1544 = vadd.f32 %v1506, %v1540
        %1546 = vset.pattern.permute.xlu0 0
        %1547 = vperm.xlu0 %1546, %v1126
        %v1548 = vpop.permute.xlu0 %1547
        %v1550 = vadd.f32 %v1543, %v1548
        %v1551 = vadd.f32 %v1544, %v1548
        %v1552 = vmax.f32 %v1550, 0.0
        %v1553 = vmax.f32 %v1551, 0.0
        %v1554 = vld [vmem:[%s7] sm:$0xf]
        %v1555 = vld [vmem:[%s7 + $0x4] sm:$0xf]
        %v1556 = vld [vmem:[%s7 + $0x8] sm:$0xf]
        %v1557 = vld [vmem:[%s7 + $0xc] sm:$0xf]
        %v1558 = vld [vmem:[%s7 + $0x10] sm:$0xf]
        %v1559 = vld [vmem:[%s7 + $0x14] sm:$0xf]
        %v1560 = vld [vmem:[%s7 + $0x18] sm:$0xf]
        %v1561 = vld [vmem:[%s7 + $0x1c] sm:$0xf]
        %v1562 = vld [vmem:[%s7 + $0x20] sm:$0xf]
        %v1563 = vpack.c.bf16 %v1552, %v1552
        %v1564 = vpack.c.bf16 %v1553, %v1553
        %v1574 = vunpack.c.l.b16 %v1554
        %v1575 = vunpack.c.l.b16 %v1555
        %v1576 = vunpack.c.l.b16 %v1556
        %v1577 = vunpack.c.l.b16 %v1557
        %v1578 = vunpack.c.l.b16 %v1558
        %v1579 = vunpack.c.l.b16 %v1559
        %v1580 = vunpack.c.l.b16 %v1560
        %v1581 = vunpack.c.l.b16 %v1561
        %v1582 = vunpack.c.l.b16 %v1562
        %v1583 = vpack.c.b16 %v1575, %v1574
        %v1584 = vpack.c.b16 %v1577, %v1576
        %v1585 = vpack.c.b16 %v1579, %v1578
        %v1586 = vpack.c.b16 %v1581, %v1580
        %v1587 = vpack.c.b16 %v1582, %v1582
        %v1589 = vsel %vm358, %v1583, 0
        %v1592 = vsel %vm358, %v1584, 0
        %v1595 = vsel %vm358, %v1585, 0
        %v1598 = vsel %vm358, %v1586, 0
        %v1601 = vsel %vm358, %v1587, 0
        %v1604 = vsel %vm362, %v1563, 0
        %v1607 = vsel %vm362, %v1564, 0
        %1609 = vmatprep.subr.bf16.mxu0 %v1607
        %1610 = vmatpush1.bf16.msra.mxu0 %v1604
        %1611 = vmatprep.subr.bf16.mxu0 0
        %1612 = vmatpush1.bf16.msra.mxu0 0
        %1613 = vmatprep.subr.bf16.mxu0 0
        %1614 = vmatpush1.bf16.msra.mxu0 0
        %1615 = vmatprep.subr.bf16.mxu0 0
        %1616 = vmatpush1.bf16.msra.mxu0 0
        %1617 = vmatprep.subr.bf16.mxu0 0
        %1618 = vmatpush1.bf16.msra.mxu0 0
        %1619 = vmatprep.subr.bf16.mxu0 0
        %1620 = vmatpush1.bf16.msra.mxu0 0
        %1621 = vmatprep.subr.bf16.mxu0 0
        %1622 = vmatpush1.bf16.msra.mxu0 0
        %1623 = vmatprep.subr.bf16.mxu0 0
        %1624 = vmatpush1.bf16.msra.mxu0 0
        %1625 = vmatprep.subr.bf16.mxu0 0
        %1626 = vmatpush1.bf16.msra.mxu0 0
        %1627 = vmatprep.subr.bf16.mxu0 0
        %1628 = vmatpush1.bf16.msra.mxu0 0
        %1629 = vmatprep.subr.bf16.mxu0 0
        %1630 = vmatpush1.bf16.msra.mxu0 0
        %1631 = vmatprep.subr.bf16.mxu0 0
        %1632 = vmatpush1.bf16.msra.mxu0 0
        %1633 = vmatprep.subr.bf16.mxu0 0
        %1634 = vmatpush1.bf16.msra.mxu0 0
        %1635 = vmatprep.subr.bf16.mxu0 0
        %1636 = vmatpush1.bf16.msra.mxu0 0
        %1637 = vmatprep.subr.bf16.mxu0 0
        %1638 = vmatpush1.bf16.msra.mxu0 0
        %1639 = vmatprep.subr.bf16.mxu0 0
        %1640 = vmatpush1.bf16.msra.mxu0 0
        %1641 = vmatprep.mubr.bf16.mxu0 0
        %1642 = vmatmul.mubr.bf16.gmra.mrb[0].mxu0 %v1589
        %v1643 = vpop.f32.mrb[0].mxu0
        %v1644 = vadd.f32 0.0, %v1643
        %v1645 = vpop.f32.mrb[0].mxu0
        %v1646 = vadd.f32 0.0, %v1645
        %v1647 = vpop.f32.mrb[0].mxu0
        %v1648 = vadd.f32 0.0, %v1647
        %v1649 = vpop.f32.mrb[0].mxu0
        %v1650 = vadd.f32 0.0, %v1649
        %1651 = vmatprep.mubr.bf16.mxu0 0
        %1652 = vmatmul.mubr.bf16.gmra.mrb[0].mxu0 %v1592
        %v1653 = vpop.f32.mrb[0].mxu0
        %v1654 = vadd.f32 0.0, %v1653
        %v1655 = vpop.f32.mrb[0].mxu0
        %v1656 = vadd.f32 0.0, %v1655
        %v1657 = vpop.f32.mrb[0].mxu0
        %v1658 = vadd.f32 0.0, %v1657
        %v1659 = vpop.f32.mrb[0].mxu0
        %v1660 = vadd.f32 0.0, %v1659
        %1661 = vmatprep.mubr.bf16.mxu0 0
        %1662 = vmatmul.mubr.bf16.gmra.mrb[0].mxu0 %v1595
        %v1663 = vpop.f32.mrb[0].mxu0
        %v1664 = vadd.f32 0.0, %v1663
        %v1665 = vpop.f32.mrb[0].mxu0
        %v1666 = vadd.f32 0.0, %v1665
        %v1667 = vpop.f32.mrb[0].mxu0
        %v1668 = vadd.f32 0.0, %v1667
        %v1669 = vpop.f32.mrb[0].mxu0
        %v1670 = vadd.f32 0.0, %v1669
        %1671 = vmatprep.mubr.bf16.mxu0 0
        %1672 = vmatmul.mubr.bf16.gmra.mrb[0].mxu0 %v1598
        %v1673 = vpop.f32.mrb[0].mxu0
        %v1674 = vadd.f32 0.0, %v1673
        %v1675 = vpop.f32.mrb[0].mxu0
        %v1676 = vadd.f32 0.0, %v1675
        %v1677 = vpop.f32.mrb[0].mxu0
        %v1678 = vadd.f32 0.0, %v1677
        %v1679 = vpop.f32.mrb[0].mxu0
        %v1680 = vadd.f32 0.0, %v1679
        %1681 = vmatprep.mubr.bf16.mxu0 0
        %1682 = vmatmul.mubr.bf16.gmra.mrb[0].mxu0 %v1601
        %v1683 = vpop.f32.mrb[0].mxu0
        %v1684 = vadd.f32 0.0, %v1683
        %v1685 = vpop.f32.mrb[0].mxu0
        %v1686 = vadd.f32 0.0, %v1685
        %v1687 = vpop.f32.mrb[0].mxu0
        %v1688 = vpop.f32.mrb[0].mxu0
        %1689 = vdwg.mxu0
        %v1690 = vld [vmem:[%s8] sm:$0xff]
        %1709 = vrot.lane.b32.xlu0 %v1644, 17
        %v1710 = vpop.permute.xlu0 %1709
        %1711 = vrot.lane.b32.xlu0 %v1646, 17
        %v1712 = vpop.permute.xlu0 %1711
        %1713 = vrot.lane.b32.xlu0 %v1648, 17
        %v1714 = vpop.permute.xlu0 %1713
        %1715 = vrot.lane.b32.xlu0 %v1650, 17
        %v1716 = vpop.permute.xlu0 %1715
        %1717 = vrot.lane.b32.xlu0 %v1654, 17
        %v1718 = vpop.permute.xlu0 %1717
        %1719 = vrot.lane.b32.xlu0 %v1656, 17
        %v1720 = vpop.permute.xlu0 %1719
        %1721 = vrot.lane.b32.xlu0 %v1658, 17
        %v1722 = vpop.permute.xlu0 %1721
        %1723 = vrot.lane.b32.xlu0 %v1660, 17
        %v1724 = vpop.permute.xlu0 %1723
        %1725 = vrot.lane.b32.xlu0 %v1664, 17
        %v1726 = vpop.permute.xlu0 %1725
        %1727 = vrot.lane.b32.xlu0 %v1666, 17
        %v1728 = vpop.permute.xlu0 %1727
        %1729 = vrot.lane.b32.xlu0 %v1668, 17
        %v1730 = vpop.permute.xlu0 %1729
        %1731 = vrot.lane.b32.xlu0 %v1670, 17
        %v1732 = vpop.permute.xlu0 %1731
        %1733 = vrot.lane.b32.xlu0 %v1674, 17
        %v1734 = vpop.permute.xlu0 %1733
        %1735 = vrot.lane.b32.xlu0 %v1676, 17
        %v1736 = vpop.permute.xlu0 %1735
        %1737 = vrot.lane.b32.xlu0 %v1678, 17
        %v1738 = vpop.permute.xlu0 %1737
        %1739 = vrot.lane.b32.xlu0 %v1680, 17
        %v1740 = vpop.permute.xlu0 %1739
        %1741 = vrot.lane.b32.xlu0 %v1684, 17
        %v1742 = vpop.permute.xlu0 %1741
        %1743 = vrot.lane.b32.xlu0 %v1686, 17
        %v1744 = vpop.permute.xlu0 %1743
        %v1745 = vsel %vm1181, %v1710, %v1712
        %v1746 = vsel %vm1181, %v1714, %v1716
        %v1747 = vsel %vm1181, %v1718, %v1720
        %v1748 = vsel %vm1181, %v1722, %v1724
        %v1749 = vsel %vm1181, %v1726, %v1728
        %v1750 = vsel %vm1181, %v1730, %v1732
        %v1751 = vsel %vm1181, %v1734, %v1736
        %v1752 = vsel %vm1181, %v1738, %v1740
        %v1753 = vsel %vm1181, %v1742, %v1744
        %v1780 = vsel %vm1181, 0.0, %v1710
        %v1781 = vsel %vm1181, 0.0, %v1714
        %v1782 = vsel %vm1181, 0.0, %v1718
        %v1783 = vsel %vm1181, 0.0, %v1722
        %v1784 = vsel %vm1181, 0.0, %v1726
        %v1785 = vsel %vm1181, 0.0, %v1730
        %v1786 = vsel %vm1181, 0.0, %v1734
        %v1787 = vsel %vm1181, 0.0, %v1738
        %v1788 = vsel %vm1181, 0.0, %v1742
        %v1789 = vsel %vm1181, %v1716, 0.0
        %v1790 = vsel %vm1181, %v1720, 0.0
        %v1791 = vsel %vm1181, %v1724, 0.0
        %v1792 = vsel %vm1181, %v1728, 0.0
        %v1793 = vsel %vm1181, %v1732, 0.0
        %v1794 = vsel %vm1181, %v1736, 0.0
        %v1795 = vsel %vm1181, %v1740, 0.0
        %v1796 = vsel %vm1181, %v1744, 0.0
        %v1797 = vmul.f32 %v1780, %v1237
        %v1798 = vmul.f32 %v1745, %v1241
        %v1799 = vadd.f32 %v1797, 0.0
        %v1800 = vadd.f32 %v1798, 0.0
        %v1801 = vmul.f32 %v1781, %v1257
        %v1802 = vmul.f32 %v1746, %v1261
        %v1803 = vmul.f32 %v1789, %v1259
        %1807 = vrot.lane.b32.xlu0 %v1801, 127
        %v1808 = vpop.permute.xlu0 %1807
        %1809 = vrot.lane.b32.xlu0 %v1802, 127
        %v1810 = vpop.permute.xlu0 %1809
        %1811 = vrot.lane.b32.xlu0 %v1803, 127
        %v1812 = vpop.permute.xlu0 %1811
        %v1813 = vsel %vm1277, %v1808, %v1810
        %v1814 = vsel %vm1277, %v1810, %v1812
        %v1817 = vadd.f32 %v1799, %v1813
        %v1818 = vadd.f32 %v1800, %v1814
        %v1819 = vmul.f32 %v1782, %v1295
        %v1820 = vmul.f32 %v1747, %v1299
        %v1821 = vmul.f32 %v1790, %v1297
        %1825 = vrot.lane.b32.xlu0 %v1819, 126
        %v1826 = vpop.permute.xlu0 %1825
        %1827 = vrot.lane.b32.xlu0 %v1820, 126
        %v1828 = vpop.permute.xlu0 %1827
        %1829 = vrot.lane.b32.xlu0 %v1821, 126
        %v1830 = vpop.permute.xlu0 %1829
        %v1831 = vsel %vm1315, %v1826, %v1828
        %v1832 = vsel %vm1315, %v1828, %v1830
        %v1835 = vadd.f32 %v1817, %v1831
        %v1836 = vadd.f32 %v1818, %v1832
        %v1837 = vmul.f32 %v1783, %v1333
        %v1838 = vmul.f32 %v1748, %v1336
        %v1839 = vmul.f32 %v1791, %v1335
        %1843 = vrot.lane.b32.xlu0 %v1837, 112
        %v1844 = vpop.permute.xlu0 %1843
        %1845 = vrot.lane.b32.xlu0 %v1838, 112
        %v1846 = vpop.permute.xlu0 %1845
        %1847 = vrot.lane.b32.xlu0 %v1839, 112
        %v1848 = vpop.permute.xlu0 %1847
        %v1849 = vsel %vm835, %v1844, %v1846
        %v1850 = vsel %vm835, %v1846, %v1848
        %v1853 = vadd.f32 %v1835, %v1849
        %v1854 = vadd.f32 %v1836, %v1850
        %v1855 = vmul.f32 %v1784, %v1369
        %v1856 = vmul.f32 %v1749, %v1372
        %v1857 = vmul.f32 %v1792, %v1371
        %1861 = vrot.lane.b32.xlu0 %v1855, 111
        %v1862 = vpop.permute.xlu0 %1861
        %1863 = vrot.lane.b32.xlu0 %v1856, 111
        %v1864 = vpop.permute.xlu0 %1863
        %1865 = vrot.lane.b32.xlu0 %v1857, 111
        %v1866 = vpop.permute.xlu0 %1865
        %v1867 = vsel %vm1388, %v1862, %v1864
        %v1868 = vsel %vm1388, %v1864, %v1866
        %v1871 = vadd.f32 %v1853, %v1867
        %v1872 = vadd.f32 %v1854, %v1868
        %v1873 = vmul.f32 %v1785, %v1406
        %v1874 = vmul.f32 %v1750, %v1410
        %v1875 = vmul.f32 %v1793, %v1408
        %1879 = vrot.lane.b32.xlu0 %v1873, 110
        %v1880 = vpop.permute.xlu0 %1879
        %1881 = vrot.lane.b32.xlu0 %v1874, 110
        %v1882 = vpop.permute.xlu0 %1881
        %1883 = vrot.lane.b32.xlu0 %v1875, 110
        %v1884 = vpop.permute.xlu0 %1883
        %v1885 = vsel %vm1426, %v1880, %v1882
        %v1886 = vsel %vm1426, %v1882, %v1884
        %v1889 = vadd.f32 %v1871, %v1885
        %v1890 = vadd.f32 %v1872, %v1886
        %v1891 = vmul.f32 %v1786, %v1444
        %v1892 = vmul.f32 %v1751, %v1447
        %v1893 = vmul.f32 %v1794, %v1446
        %1897 = vrot.lane.b32.xlu0 %v1891, 96
        %v1898 = vpop.permute.xlu0 %1897
        %1899 = vrot.lane.b32.xlu0 %v1892, 96
        %v1900 = vpop.permute.xlu0 %1899
        %1901 = vrot.lane.b32.xlu0 %v1893, 96
        %v1902 = vpop.permute.xlu0 %1901
        %v1903 = vsel %vm833, %v1898, %v1900
        %v1904 = vsel %vm833, %v1900, %v1902
        %v1907 = vadd.f32 %v1889, %v1903
        %v1908 = vadd.f32 %v1890, %v1904
        %v1909 = vmul.f32 %v1787, %v1480
        %v1910 = vmul.f32 %v1752, %v1484
        %v1911 = vmul.f32 %v1795, %v1482
        %1915 = vrot.lane.b32.xlu0 %v1909, 95
        %v1916 = vpop.permute.xlu0 %1915
        %1917 = vrot.lane.b32.xlu0 %v1910, 95
        %v1918 = vpop.permute.xlu0 %1917
        %1919 = vrot.lane.b32.xlu0 %v1911, 95
        %v1920 = vpop.permute.xlu0 %1919
        %v1921 = vsel %vm1500, %v1916, %v1918
        %v1922 = vsel %vm1500, %v1918, %v1920
        %v1925 = vadd.f32 %v1907, %v1921
        %v1926 = vadd.f32 %v1908, %v1922
        %v1927 = vmul.f32 %v1788, %v1518
        %v1928 = vmul.f32 %v1753, %v1522
        %v1929 = vmul.f32 %v1796, %v1520
        %1933 = vrot.lane.b32.xlu0 %v1927, 94
        %v1934 = vpop.permute.xlu0 %1933
        %1935 = vrot.lane.b32.xlu0 %v1928, 94
        %v1936 = vpop.permute.xlu0 %1935
        %1937 = vrot.lane.b32.xlu0 %v1929, 94
        %v1938 = vpop.permute.xlu0 %1937
        %v1939 = vsel %vm1538, %v1934, %v1936
        %v1940 = vsel %vm1538, %v1936, %v1938
        %v1943 = vadd.f32 %v1925, %v1939
        %v1944 = vadd.f32 %v1926, %v1940
        %1946 = vset.pattern.permute.xlu0 0
        %1947 = vperm.xlu0 %1946, %v1690
        %v1948 = vpop.permute.xlu0 %1947
        %v1950 = vadd.f32 %v1943, %v1948
        %v1951 = vadd.f32 %v1944, %v1948
        %v1952 = vmax.f32 %v1950, 0.0
        %v1953 = vmax.f32 %v1951, 0.0
        %1954 = vst [vmem:[%s340] sm:$0xff] %v1952
        %1955 = vst [vmem:[%s340 + $0x8] sm:$0xff] %v1953
        %s1956 = sand.u32 %s230, 1
        %s1957 = scalar_lea.sflag [#allocation3], %s1956
        %s1958 = sand.u32 %s230, 1
        %s1959 = smul.addr %s1958, 16
        %s1960 = scalar_lea.vmem [#allocation2], %s1959
        // Predicated region
        $region57: #{tpu_custom_call.1} parent=55 // pred_check
          %p1961 = pneg %p240
        $region58: #{tpu_custom_call.1} parent=55 // pred_check_branch
          %1963 = sbr.rel (%p1961) target = $region60
        $region59: #{tpu_custom_call.1} parent=55 // pred_region
          %s1965 = ssub.s32 256, 256
          %1966 = vsyncadd %s1957, %s1965
          %s1967 = smul.addr %s23, 2
          %s1968 = smul.addr %s1967, 128
          %s1969 = scalar_lea.hbm %s9, %s1968
          %s1971 = sshll.u32 %s1960, 4
          %s1972 = int_to_ptr.vmem [resolvable:$true] %s1971
          %1974 = dma.vmem_to_hbm [thread:$0]  %s1972, 256, %s1969, %s1957
        $region60: #{tpu_custom_call.1} parent=55 // pred_fallthru
          _
      $region56: #{tpu_custom_call.1} parent=5 // pred_fallthru
        _
      %p1975 = scmp.le.s32.totalorder 2, %s18
      // Predicated region
      $region61: #{tpu_custom_call.1} parent=5 // pred_check
        %p1976 = pneg %p1975
      $region62: #{tpu_custom_call.1} parent=5 // pred_check_branch
        %1978 = sbr.rel (%p1976) target = $region64
      $region63: #{tpu_custom_call.1} parent=5 // pred_region
        %s1979 = ssub.s32 %s18, 2
        // Predicated region
        $region65: #{tpu_custom_call.1} parent=63 // pred_check
          %p1980 = pneg %p246
        $region66: #{tpu_custom_call.1} parent=63 // pred_check_branch
          %1982 = sbr.rel (%p1980) target = $region68
        $region67: #{tpu_custom_call.1} parent=63 // pred_region
          %s1983 = sand.u32 %s231, 1
          %s1984 = scalar_lea.sflag [#allocation3], %s1983
          %s1985 = sand.u32 %s231, 1
          %s1986 = smul.addr %s1985, 16
          %s1987 = scalar_lea.vmem [#allocation2], %s1986
          %1988 = dma.done %s1984, 256
        $region68: #{tpu_custom_call.1} parent=63 // pred_fallthru
          _
      $region64: #{tpu_custom_call.1} parent=5 // pred_fallthru
        _
    $region6: #{tpu_custom_call.1} parent=1 // loop_footer
      %s22 = sadd.s32 1, %s18
    $region7: #{tpu_custom_call.1} parent=1 // loop_footer_branch
      %17 = sbr.rel target = $region3
    $region8: #{tpu_custom_call.1} parent=1 // loop_exit
      _
    %1989 = vsyncpa [#allocation3], 1
    %s1990 = scalar_lea.sflag [#allocation3], 1
    %1991 = vsyncpa %s1990, 1

</llo_original>
